<compile_context>
chip_gen: v5e
topology: v5e:2x2
jax: 0.10.0
libtpu: 0.0.40
codegen_flags: <defaults>
</compile_context>

<pallas_src>
import functools

import jax
import jax.numpy as jnp
from jax import lax
from jax.experimental import pallas as pl
from jax.experimental.pallas import tpu as pltpu


def _prenorm_attention_kernel(xw_ref, gamma_ref, beta_ref, mean_ref, wqkv_ref,
                              wproj_ref, bias_ref, hmask_ref, out_ref, *, eps):
    # xw_ref: (BB, N, 2C) block; lanes [0, C) are the x stream, [C, 2C) the y
    # stream of the same token.  Batch is folded into MXU rows.
    BB, N, C2 = xw_ref.shape
    C = C2 // 2
    R = BB * N                       # rows fed to the MXU this grid step
    KW = hmask_ref.shape[0]          # expanded key width = 2 * heads * N
    SH = KW // N                     # number of (stream, head) blocks

    xw = xw_ref[...].reshape(R, C2)                                    # f32

    # ---- PreNorm: shared LayerNorm, per stream (f32) -----------------------
    # Per-stream mean / variance via a block-averaging matmul (MXU has slack;
    # avoids sub-vreg partial-lane reductions in the wide layout).
    mean_mat = mean_ref[...]                                           # (2C, 2C)
    mu = jnp.dot(xw, mean_mat, preferred_element_type=jnp.float32)
    xc = xw - mu
    var = jnp.dot(xc * xc, mean_mat, preferred_element_type=jnp.float32)
    xn = xc * lax.rsqrt(var + eps) * gamma_ref[...] + beta_ref[...]    # (R, 2C)

    # ---- QKV: one lane-dense (R, 2C) @ (2C, 6C) bf16 matmul ----------------
    # (attention scale folded into the q block, cross-value stream swap folded
    #  into the anti-block-diagonal v block -- both done in the wrapper).
    qkv = jnp.dot(xn.astype(jnp.bfloat16), wqkv_ref[...],
                  preferred_element_type=jnp.float32)                  # (R, 6C)
    q = qkv[:, 0:C2]                 # vreg-aligned 128-lane splits
    k = qkv[:, C2:2 * C2]
    v = qkv[:, 2 * C2:3 * C2]        # lanes [0,C) already hold v(y), [C,2C) v(x)

    # ---- all (stream, head) attention blocks, no per-head loop -------------
    # k / v are expanded along sublanes to (BB, 2*H*N, 2C) and masked with the
    # block-diagonal (stream, head) mask, so scores and values are plain
    # single-batch-dim, lane-dense contractions over the full 2C channels.
    hmask = hmask_ref[...]                                             # (KW, 2C)

    def expand(t):                   # (R, 2C) -> (BB, KW, 2C) bf16, block-masked
        t4 = jnp.broadcast_to(t.reshape(BB, 1, N, C2), (BB, SH, N, C2))
        return (t4.reshape(BB, KW, C2) * hmask).astype(jnp.bfloat16)

    q3 = q.reshape(BB, N, C2).astype(jnp.bfloat16)
    k_exp = expand(k)
    v_exp = expand(v)

    # s[b, n, g*N + m] = <q of block g at token n, k of block g at token m>
    s = jnp.einsum('bnc,bkc->bnk', q3, k_exp,
                   preferred_element_type=jnp.float32)                 # (BB, N, KW)
    # Row-global max is a valid stabilizer (all exponents <= 0); normalization
    # below is per (stream, head) block.
    s = s - jnp.max(s, axis=-1, keepdims=True)
    e = jnp.exp(s)                                                     # f32

    # Unnormalized attention output; the same block mask broadcasts each
    # block's softmax denominator to that block's output lanes.
    o = jnp.einsum('bnk,bkc->bnc', e.astype(jnp.bfloat16), v_exp,
                   preferred_element_type=jnp.float32)                 # (BB, N, 2C)
    denom = jnp.dot(e.reshape(R, KW), hmask,
                    preferred_element_type=jnp.float32)                # (R, 2C)
    attn = o.reshape(R, C2) * pl.reciprocal(denom, approx=True)

    # ---- output projection + bias + residual (= the normalized input) ------
    out = jnp.dot(attn.astype(jnp.bfloat16), wproj_ref[...],
                  preferred_element_type=jnp.float32)
    out = out + bias_ref[...] + xn                                     # (R, 2C)
    out_ref[...] = out.reshape(BB, N, C2).astype(out_ref.dtype)


def prenorm_self_attention_pallas(x, y, gamma, beta, w_qkv, w_proj, b_proj,
                                  *, heads, eps=1e-5, block_batch=None):
    B, N, C = x.shape
    D = C // heads
    C2 = 2 * C
    scale = D ** (-0.5)
    f32 = jnp.float32

    zeros = jnp.zeros((C, C), f32)
    wq = w_qkv[:, 0:C].astype(f32) * scale       # fold attention scale into q
    wk = w_qkv[:, C:2 * C].astype(f32)
    wv = w_qkv[:, 2 * C:3 * C].astype(f32)

    # Wide-layout weights: the shared weights become block-diagonal; the
    # cross-value wiring (x uses v(y), y uses v(x)) becomes an
    # anti-block-diagonal value weight, so the stream swap is free in-kernel.
    wq_w = jnp.block([[wq, zeros], [zeros, wq]])
    wk_w = jnp.block([[wk, zeros], [zeros, wk]])
    wv_w = jnp.block([[zeros, wv], [wv, zeros]])
    w_qkv_wide = jnp.concatenate([wq_w, wk_w, wv_w], axis=1).astype(jnp.bfloat16)
    w_proj_wide = jnp.block([[w_proj, zeros], [zeros, w_proj]]).astype(jnp.bfloat16)

    gamma_w = jnp.concatenate([gamma, gamma]).reshape(1, C2).astype(f32)
    beta_w = jnp.concatenate([beta, beta]).reshape(1, C2).astype(f32)
    bias_w = jnp.concatenate([b_proj, b_proj]).reshape(1, C2).astype(f32)

    # Per-stream averaging matrix for the LayerNorm statistics.
    lane = jnp.arange(C2)
    mean_mat = jnp.where((lane[:, None] // C) == (lane[None, :] // C),
                         1.0 / C, 0.0).astype(f32)
    # (stream, head) block mask for the expanded key / value operands.
    krow = jnp.arange(2 * heads * N)
    head_mask = jnp.where((krow[:, None] // N) == (lane[None, :] // D),
                          1.0, 0.0).astype(f32)

    # Lane-dense input: both streams of a token share one row.
    xw = jnp.concatenate([x, y], axis=-1)        # (B, N, 2C)

    if block_batch is None:
        # Fold batch into MXU rows (~128 rows / grid step; raise toward ~256
        # on v6e / v7x when B allows, and cap at B // 2 on v7x to keep both
        # TensorCores busy once per-step rows are large).  With B=2, N=16
        # this collapses to a single grid step, as suggested in the review.
        block_batch = max(1, min(B, 128 // N))
    while B % block_batch:
        block_batch -= 1
    BB = block_batch

    kernel = functools.partial(_prenorm_attention_kernel, eps=eps)

    out = pl.pallas_call(
        kernel,
        out_shape=jax.ShapeDtypeStruct((B, N, C2), x.dtype),
        grid_spec=pltpu.PrefetchScalarGridSpec(
            num_scalar_prefetch=0,
            grid=(B // BB,),
            in_specs=[
                pl.BlockSpec((BB, N, C2), lambda b: (b, 0, 0)),        # xw
                pl.BlockSpec((1, C2), lambda b: (0, 0)),               # gamma
                pl.BlockSpec((1, C2), lambda b: (0, 0)),               # beta
                pl.BlockSpec((C2, C2), lambda b: (0, 0)),              # LN mean matrix
                pl.BlockSpec((C2, 3 * C2), lambda b: (0, 0)),          # packed QKV weight
                pl.BlockSpec((C2, C2), lambda b: (0, 0)),              # proj weight
                pl.BlockSpec((1, C2), lambda b: (0, 0)),               # proj bias
                pl.BlockSpec((2 * heads * N, C2), lambda b: (0, 0)),   # head mask
            ],
            out_specs=pl.BlockSpec((BB, N, C2), lambda b: (b, 0, 0)),
        ),
        compiler_params=pltpu.CompilerParams(
            dimension_semantics=("parallel",)),
    )(xw, gamma_w, beta_w, mean_mat, w_qkv_wide, w_proj_wide, bias_w, head_mask)

    return out[:, :, 0:C], out[:, :, C:C2]


def prenorm_self_attention_reference(x, y, gamma, beta, w_qkv, w_proj, b_proj,
                                     *, heads, eps=1e-5, bf16_dots=False):
    """Pure-JAX reference for PreNorm(LayerNorm) -> cross-value SelfAttention.

    With bf16_dots=True the matmul operands are rounded to bf16 (f32
    accumulation), mirroring the kernel's MXU numerics exactly.
    """
    B, N, C = x.shape
    D = C // heads
    scale = D ** (-0.5)
    cast = (lambda t: t.astype(jnp.bfloat16)) if bf16_dots else (lambda t: t)

    def ln(t):
        mu = t.mean(-1, keepdims=True)
        var = ((t - mu) ** 2).mean(-1, keepdims=True)
        return (t - mu) * lax.rsqrt(var + eps) * gamma + beta

    xn, yn = ln(x), ln(y)

    wq = w_qkv[:, 0:C] * scale
    wk = w_qkv[:, C:2 * C]
    wv = w_qkv[:, 2 * C:3 * C]

    def heads_split(t):
        return t.reshape(B, N, heads, D).transpose(0, 2, 1, 3)     # (B, H, N, D)

    def qkv(t):
        tb = cast(t)
        q = heads_split(jnp.einsum('bnc,cd->bnd', tb, cast(wq),
                                   preferred_element_type=jnp.float32))
        k = heads_split(jnp.einsum('bnc,cd->bnd', tb, cast(wk),
                                   preferred_element_type=jnp.float32))
        v = heads_split(jnp.einsum('bnc,cd->bnd', tb, cast(wv),
                                   preferred_element_type=jnp.float32))
        return q, k, v

    qx, kx, vx = qkv(xn)
    qy, ky, vy = qkv(yn)

    def attend(q, k, v_other):
        s = jnp.einsum('bhnd,bhmd->bhnm', cast(q), cast(k),
                       preferred_element_type=jnp.float32)          # scale in wq
        s = s - jnp.max(s, axis=-1, keepdims=True)
        e = jnp.exp(s)
        o = jnp.einsum('bhnm,bhmd->bhnd', cast(e), cast(v_other),
                       preferred_element_type=jnp.float32)
        o = o / jnp.sum(e, axis=-1, keepdims=True)
        return o.transpose(0, 2, 1, 3).reshape(B, N, C)

    ox = attend(qx, kx, vy)
    oy = attend(qy, ky, vx)

    ox = jnp.einsum('bnc,cd->bnd', cast(ox), cast(w_proj),
                    preferred_element_type=jnp.float32) + b_proj + xn
    oy = jnp.einsum('bnc,cd->bnd', cast(oy), cast(w_proj),
                    preferred_element_type=jnp.float32) + b_proj + yn
    return ox, oy


if __name__ == "__main__":
    # Small shapes consistent with the module: B=2, N=16 tokens, C=64 dim, 8 heads.
    B, N, C, HEADS = 2, 16, 64, 8

    key = jax.random.PRNGKey(0)
    kx, ky, kg, kb, kw1, kw2, kbp = jax.random.split(key, 7)

    x = jax.random.normal(kx, (B, N, C), dtype=jnp.float32)
    y = jax.random.normal(ky, (B, N, C), dtype=jnp.float32)

    gamma = 1.0 + 0.1 * jax.random.normal(kg, (C,), dtype=jnp.float32)
    beta = 0.05 * jax.random.normal(kb, (C,), dtype=jnp.float32)
    w_qkv = jax.random.normal(kw1, (C, 3 * C), dtype=jnp.float32) * (C ** -0.5)
    w_proj = jax.random.normal(kw2, (C, C), dtype=jnp.float32) * (C ** -0.5)
    b_proj = 0.02 * jax.random.normal(kbp, (C,), dtype=jnp.float32)

    out_x, out_y = prenorm_self_attention_pallas(
        x, y, gamma, beta, w_qkv, w_proj, b_proj, heads=HEADS)
    jax.block_until_ready((out_x, out_y))

    # (1) Numerics-matched reference: same bf16 cast points as the kernel's
    #     MXU inputs.  Validates the fused wiring tightly; the remaining gap
    #     is the approximate softmax reciprocal plus bf16 rounding noise.
    mp_x, mp_y = prenorm_self_attention_reference(
        x, y, gamma, beta, w_qkv, w_proj, b_proj, heads=HEADS, bf16_dots=True)
    assert jnp.allclose(out_x, mp_x, atol=2e-2, rtol=2e-2), "x mismatch (matched)"
    assert jnp.allclose(out_y, mp_y, atol=2e-2, rtol=2e-2), "y mismatch (matched)"

    # (2) Full-f32 reference (PyTorch forward semantics).  The looser bound
    #     accounts for bf16 MXU operands (f32 accumulation) and the EUP
    #     approximate reciprocal in the softmax normalization.
    ref_x, ref_y = prenorm_self_attention_reference(
        x, y, gamma, beta, w_qkv, w_proj, b_proj, heads=HEADS, bf16_dots=False)
    assert jnp.allclose(out_x, ref_x, atol=8e-2, rtol=2e-2), "x mismatch (f32)"
    assert jnp.allclose(out_y, ref_y, atol=8e-2, rtol=2e-2), "y mismatch (f32)"

    print("KERNEL_OK")
</pallas_src>

<mosaic_0001>
module attributes {stable_mosaic.version = 11 : i64} {
  func.func @_prenorm_attention_kernel(%arg0: i32, %arg1: memref<2x16x128xf32, #tpu.memory_space<vmem>>, %arg2: memref<1x128xf32, #tpu.memory_space<vmem>>, %arg3: memref<1x128xf32, #tpu.memory_space<vmem>>, %arg4: memref<128x128xf32, #tpu.memory_space<vmem>>, %arg5: memref<128x384xbf16, #tpu.memory_space<vmem>>, %arg6: memref<128x128xbf16, #tpu.memory_space<vmem>>, %arg7: memref<1x128xf32, #tpu.memory_space<vmem>>, %arg8: memref<256x128xf32, #tpu.memory_space<vmem>>, %arg9: memref<2x16x128xf32, #tpu.memory_space<vmem>>) attributes {dimension_semantics = [#tpu.dimension_semantics<parallel>], iteration_bounds = array<i64: 1>, scalar_prefetch = 0 : i64, scratch_operands = 0 : i64, tpu.core_type = #tpu.core_type<tc>, window_params = [{transform_indices = @transform_0, window_bounds = array<i64: 2, 16, 128>}, {pipeline_mode = #tpu.pipeline_mode<synchronous>, transform_indices = @transform_1, window_bounds = array<i64: 1, 128>}, {pipeline_mode = #tpu.pipeline_mode<synchronous>, transform_indices = @transform_2, window_bounds = array<i64: 1, 128>}, {pipeline_mode = #tpu.pipeline_mode<synchronous>, transform_indices = @transform_3, window_bounds = array<i64: 128, 128>}, {pipeline_mode = #tpu.pipeline_mode<synchronous>, transform_indices = @transform_4, window_bounds = array<i64: 128, 384>}, {pipeline_mode = #tpu.pipeline_mode<synchronous>, transform_indices = @transform_5, window_bounds = array<i64: 128, 128>}, {pipeline_mode = #tpu.pipeline_mode<synchronous>, transform_indices = @transform_6, window_bounds = array<i64: 1, 128>}, {pipeline_mode = #tpu.pipeline_mode<synchronous>, transform_indices = @transform_7, window_bounds = array<i64: 256, 128>}, {transform_indices = @transform_8, window_bounds = array<i64: 2, 16, 128>}]} {
    %c0 = arith.constant 0 : index
    %c0_0 = arith.constant 0 : index
    %c0_1 = arith.constant 0 : index
    %0 = vector.load %arg1[%c0, %c0_0, %c0_1] : memref<2x16x128xf32, #tpu.memory_space<vmem>>, vector<2x16x128xf32>
    %1 = vector.shape_cast %0 : vector<2x16x128xf32> to vector<32x128xf32>
    %c0_2 = arith.constant 0 : index
    %c0_3 = arith.constant 0 : index
    %2 = vector.load %arg4[%c0_2, %c0_3] : memref<128x128xf32, #tpu.memory_space<vmem>>, vector<128x128xf32>
    %cst = arith.constant dense<0.000000e+00> : vector<32x128xf32>
    %3 = tpu.matmul %1, %2, %cst {dimension_numbers = #tpu.dot_dimension_numbers<[1], [0], [0], [1], [0, 0, 1, 1], [], []>} : vector<32x128xf32>, vector<128x128xf32>, vector<32x128xf32> -> vector<32x128xf32>
    %4 = arith.subf %1, %3 : vector<32x128xf32>
    %5 = arith.mulf %4, %4 : vector<32x128xf32>
    %cst_4 = arith.constant dense<0.000000e+00> : vector<32x128xf32>
    %6 = tpu.matmul %5, %2, %cst_4 {dimension_numbers = #tpu.dot_dimension_numbers<[1], [0], [0], [1], [0, 0, 1, 1], [], []>} : vector<32x128xf32>, vector<128x128xf32>, vector<32x128xf32> -> vector<32x128xf32>
    %cst_5 = arith.constant 9.99999974E-6 : f32
    %7 = vector.broadcast %cst_5 : f32 to vector<32x128xf32>
    %8 = arith.addf %6, %7 : vector<32x128xf32>
    %9 = math.rsqrt %8 : vector<32x128xf32>
    %10 = arith.mulf %4, %9 : vector<32x128xf32>
    %c0_6 = arith.constant 0 : index
    %c0_7 = arith.constant 0 : index
    %11 = vector.load %arg2[%c0_6, %c0_7] : memref<1x128xf32, #tpu.memory_space<vmem>>, vector<1x128xf32>
    %12 = vector.broadcast %11 : vector<1x128xf32> to vector<32x128xf32>
    %13 = arith.mulf %10, %12 : vector<32x128xf32>
    %c0_8 = arith.constant 0 : index
    %c0_9 = arith.constant 0 : index
    %14 = vector.load %arg3[%c0_8, %c0_9] : memref<1x128xf32, #tpu.memory_space<vmem>>, vector<1x128xf32>
    %15 = vector.broadcast %14 : vector<1x128xf32> to vector<32x128xf32>
    %16 = arith.addf %13, %15 : vector<32x128xf32>
    %17 = arith.truncf %16 : vector<32x128xf32> to vector<32x128xbf16>
    %c0_10 = arith.constant 0 : index
    %c0_11 = arith.constant 0 : index
    %18 = vector.load %arg5[%c0_10, %c0_11] : memref<128x384xbf16, #tpu.memory_space<vmem>>, vector<128x384xbf16>
    %cst_12 = arith.constant dense<0.000000e+00> : vector<32x384xf32>
    %19 = tpu.matmul %17, %18, %cst_12 {dimension_numbers = #tpu.dot_dimension_numbers<[1], [0], [0], [1], [0, 0, 1, 1], [], []>} : vector<32x128xbf16>, vector<128x384xbf16>, vector<32x384xf32> -> vector<32x384xf32>
    %20 = vector.extract_strided_slice %19 {offsets = [0, 0], sizes = [32, 128], strides = [1, 1]} : vector<32x384xf32> to vector<32x128xf32>
    %21 = vector.extract_strided_slice %19 {offsets = [0, 128], sizes = [32, 128], strides = [1, 1]} : vector<32x384xf32> to vector<32x128xf32>
    %22 = vector.extract_strided_slice %19 {offsets = [0, 256], sizes = [32, 128], strides = [1, 1]} : vector<32x384xf32> to vector<32x128xf32>
    %c0_13 = arith.constant 0 : index
    %c0_14 = arith.constant 0 : index
    %23 = vector.load %arg8[%c0_13, %c0_14] : memref<256x128xf32, #tpu.memory_space<vmem>>, vector<256x128xf32>
    %24 = vector.shape_cast %20 : vector<32x128xf32> to vector<2x16x128xf32>
    %25 = arith.truncf %24 : vector<2x16x128xf32> to vector<2x16x128xbf16>
    %26 = vector.shape_cast %21 : vector<32x128xf32> to vector<2x1x16x128xf32>
    %27 = vector.shape_cast %26 : vector<2x1x16x128xf32> to vector<2x1x16x128xf32>
    %28 = vector.broadcast %27 : vector<2x1x16x128xf32> to vector<2x16x16x128xf32>
    %29 = vector.shape_cast %28 : vector<2x16x16x128xf32> to vector<2x256x128xf32>
    %30 = vector.shape_cast %23 : vector<256x128xf32> to vector<1x256x128xf32>
    %31 = vector.broadcast %30 : vector<1x256x128xf32> to vector<2x256x128xf32>
    %32 = arith.mulf %29, %31 : vector<2x256x128xf32>
    %33 = arith.truncf %32 : vector<2x256x128xf32> to vector<2x256x128xbf16>
    %34 = vector.shape_cast %22 : vector<32x128xf32> to vector<2x1x16x128xf32>
    %35 = vector.shape_cast %34 : vector<2x1x16x128xf32> to vector<2x1x16x128xf32>
    %36 = vector.broadcast %35 : vector<2x1x16x128xf32> to vector<2x16x16x128xf32>
    %37 = vector.shape_cast %36 : vector<2x16x16x128xf32> to vector<2x256x128xf32>
    %38 = vector.shape_cast %23 : vector<256x128xf32> to vector<1x256x128xf32>
    %39 = vector.broadcast %38 : vector<1x256x128xf32> to vector<2x256x128xf32>
    %40 = arith.mulf %37, %39 : vector<2x256x128xf32>
    %41 = arith.truncf %40 : vector<2x256x128xf32> to vector<2x256x128xbf16>
    "tpu.trace_start"() <{level = 10 : i32, message = "bnc,bkc->bnk"}> : () -> ()
    %cst_15 = arith.constant dense<0.000000e+00> : vector<2x16x256xf32>
    %42 = tpu.matmul %25, %33, %cst_15 {dimension_numbers = #tpu.dot_dimension_numbers<[2], [2], [1], [1], [0, 0, 0, 1, 1, 1], [0], [0]>} : vector<2x16x128xbf16>, vector<2x256x128xbf16>, vector<2x16x256xf32> -> vector<2x16x256xf32>
    "tpu.trace_stop"() : () -> ()
    %cst_16 = arith.constant dense<0xFF800000> : vector<2x16xf32>
    %43 = vector.multi_reduction <maximumf>, %42, %cst_16 [2] : vector<2x16x256xf32> to vector<2x16xf32>
    %44 = vector.shape_cast %43 : vector<2x16xf32> to vector<2x16x1xf32>
    %45 = vector.broadcast %44 : vector<2x16x1xf32> to vector<2x16x256xf32>
    %46 = arith.subf %42, %45 : vector<2x16x256xf32>
    %47 = math.exp %46 : vector<2x16x256xf32>
    %48 = arith.truncf %47 : vector<2x16x256xf32> to vector<2x16x256xbf16>
    "tpu.trace_start"() <{level = 10 : i32, message = "bnk,bkc->bnc"}> : () -> ()
    %cst_17 = arith.constant dense<0.000000e+00> : vector<2x16x128xf32>
    %49 = tpu.matmul %48, %41, %cst_17 {dimension_numbers = #tpu.dot_dimension_numbers<[2], [1], [1], [2], [0, 0, 0, 1, 1, 2], [0], [0]>} : vector<2x16x256xbf16>, vector<2x256x128xbf16>, vector<2x16x128xf32> -> vector<2x16x128xf32>
    "tpu.trace_stop"() : () -> ()
    %50 = vector.shape_cast %47 : vector<2x16x256xf32> to vector<32x256xf32>
    %cst_18 = arith.constant dense<0.000000e+00> : vector<32x128xf32>
    %51 = tpu.matmul %50, %23, %cst_18 {dimension_numbers = #tpu.dot_dimension_numbers<[1], [0], [0], [1], [0, 0, 1, 1], [], []>} : vector<32x256xf32>, vector<256x128xf32>, vector<32x128xf32> -> vector<32x128xf32>
    %52 = vector.shape_cast %49 : vector<2x16x128xf32> to vector<32x128xf32>
    %53 = tpu.reciprocal %51 {approx = true} : vector<32x128xf32> -> vector<32x128xf32>
    %54 = arith.mulf %52, %53 : vector<32x128xf32>
    %55 = arith.truncf %54 : vector<32x128xf32> to vector<32x128xbf16>
    %c0_19 = arith.constant 0 : index
    %c0_20 = arith.constant 0 : index
    %56 = vector.load %arg6[%c0_19, %c0_20] : memref<128x128xbf16, #tpu.memory_space<vmem>>, vector<128x128xbf16>
    %cst_21 = arith.constant dense<0.000000e+00> : vector<32x128xf32>
    %57 = tpu.matmul %55, %56, %cst_21 {dimension_numbers = #tpu.dot_dimension_numbers<[1], [0], [0], [1], [0, 0, 1, 1], [], []>} : vector<32x128xbf16>, vector<128x128xbf16>, vector<32x128xf32> -> vector<32x128xf32>
    %c0_22 = arith.constant 0 : index
    %c0_23 = arith.constant 0 : index
    %58 = vector.load %arg7[%c0_22, %c0_23] : memref<1x128xf32, #tpu.memory_space<vmem>>, vector<1x128xf32>
    %59 = vector.broadcast %58 : vector<1x128xf32> to vector<32x128xf32>
    %60 = arith.addf %57, %59 : vector<32x128xf32>
    %61 = arith.addf %60, %16 : vector<32x128xf32>
    %62 = vector.shape_cast %61 : vector<32x128xf32> to vector<2x16x128xf32>
    %c0_24 = arith.constant 0 : index
    %c0_25 = arith.constant 0 : index
    %c0_26 = arith.constant 0 : index
    %63 = vector.load %arg9[%c0_24, %c0_25, %c0_26] : memref<2x16x128xf32, #tpu.memory_space<vmem>>, vector<2x16x128xf32>
    tpu.vector_store %arg9[%c0_24, %c0_25, %c0_26], %62 {strides = array<i32>} : memref<2x16x128xf32, #tpu.memory_space<vmem>>, vector<2x16x128xf32>,
    return
  }
  func.func @transform_0(%arg0: i32) -> (i32, i32, i32) {
    %c0_i32 = arith.constant 0 : i32
    %c0_i32_0 = arith.constant 0 : i32
    %c0_i32_1 = arith.constant 0 : i32
    return %arg0, %c0_i32, %c0_i32_0 : i32, i32, i32
  }
  func.func @transform_1(%arg0: i32) -> (i32, i32) {
    %c0_i32 = arith.constant 0 : i32
    %c0_i32_0 = arith.constant 0 : i32
    %c0_i32_1 = arith.constant 0 : i32
    return %c0_i32, %c0_i32_0 : i32, i32
  }
  func.func @transform_2(%arg0: i32) -> (i32, i32) {
    %c0_i32 = arith.constant 0 : i32
    %c0_i32_0 = arith.constant 0 : i32
    %c0_i32_1 = arith.constant 0 : i32
    return %c0_i32, %c0_i32_0 : i32, i32
  }
  func.func @transform_3(%arg0: i32) -> (i32, i32) {
    %c0_i32 = arith.constant 0 : i32
    %c0_i32_0 = arith.constant 0 : i32
    %c0_i32_1 = arith.constant 0 : i32
    return %c0_i32, %c0_i32_0 : i32, i32
  }
  func.func @transform_4(%arg0: i32) -> (i32, i32) {
    %c0_i32 = arith.constant 0 : i32
    %c0_i32_0 = arith.constant 0 : i32
    %c0_i32_1 = arith.constant 0 : i32
    return %c0_i32, %c0_i32_0 : i32, i32
  }
  func.func @transform_5(%arg0: i32) -> (i32, i32) {
    %c0_i32 = arith.constant 0 : i32
    %c0_i32_0 = arith.constant 0 : i32
    %c0_i32_1 = arith.constant 0 : i32
    return %c0_i32, %c0_i32_0 : i32, i32
  }
  func.func @transform_6(%arg0: i32) -> (i32, i32) {
    %c0_i32 = arith.constant 0 : i32
    %c0_i32_0 = arith.constant 0 : i32
    %c0_i32_1 = arith.constant 0 : i32
    return %c0_i32, %c0_i32_0 : i32, i32
  }
  func.func @transform_7(%arg0: i32) -> (i32, i32) {
    %c0_i32 = arith.constant 0 : i32
    %c0_i32_0 = arith.constant 0 : i32
    %c0_i32_1 = arith.constant 0 : i32
    return %c0_i32, %c0_i32_0 : i32, i32
  }
  func.func @transform_8(%arg0: i32) -> (i32, i32, i32) {
    %c0_i32 = arith.constant 0 : i32
    %c0_i32_0 = arith.constant 0 : i32
    %c0_i32_1 = arith.constant 0 : i32
    return %arg0, %c0_i32, %c0_i32_0 : i32, i32, i32
  }
}

</mosaic_0001>

<llo_original>
// kernel: tpu_custom_call.1
$region0: #{tpu_custom_call.1}
  #allocation0 [shape = 'u32[]', space=smem, size = 0x4, offset = 0x4, fixed_abs, tag = 'smem constant byte address 0x4 - core index']
  #allocation1 [shape = 'u32[72,128]{1,0:T(1,128)}', space=vmem, size = 0x9000, scoped, tag = 'internal scratch']
  %s0 = inlined_call_operand.hbm [shape: f32[2,16,128], index: 0, kind: input, shape index: {}]
  %s1 = inlined_call_operand.hbm [shape: f32[1,128], index: 1, kind: input, shape index: {}]
  %s2 = inlined_call_operand.vmem [shape: f32[1,128], index: 2, kind: input, shape index: {}]
  %s3 = inlined_call_operand.hbm [shape: f32[128,128], index: 3, kind: input, shape index: {}]
  %s4 = inlined_call_operand.hbm [shape: bf16[128,384], index: 4, kind: input, shape index: {}]
  %s5 = inlined_call_operand.hbm [shape: bf16[128,128], index: 5, kind: input, shape index: {}]
  %s6 = inlined_call_operand.vmem [shape: f32[1,128], index: 6, kind: input, shape index: {}]
  %s7 = inlined_call_operand.hbm [shape: f32[256,128], index: 7, kind: input, shape index: {}]
  %s8 = inlined_call_operand.hbm [shape: f32[2,16,128], index: 8, kind: output, shape index: {}]
  %s9 = sld [smem:[#allocation0]]
  $region66: #{tpu_custom_call.1} parent=0
    _
  %s11 = ssub.s32 1, %s9
  %s12 = scalar_select 0, %s11, %s9
  $region1: #{tpu_custom_call.1} parent=0
    #allocation2 [shape = 'u8[16384]{0}', space=vmem, size = 0x4000, scoped, tag = 'input window, operand 0, single buffered']
    #allocation3 [shape = 's32[1]{0}', space=sflag, size = 0x4, scoped, tag = 'scoped memory for tpu_custom_call.1']
    #allocation4 [shape = 's32[1]{0}', space=sflag, size = 0x4, scoped, tag = 'scoped memory for tpu_custom_call.1']
    #allocation5 [shape = 'u8[512]{0}', space=vmem, size = 0x400, scoped, tag = 'input window, operand 1, single buffered']
    #allocation6 [shape = 's32[1]{0}', space=sflag, size = 0x4, scoped, tag = 'scoped memory for tpu_custom_call.1']
    #allocation7 [shape = 'u8[65536]{0}', space=vmem, size = 0x10000, scoped, tag = 'input window, operand 3, single buffered']
    #allocation8 [shape = 'u8[98304]{0}', space=vmem, size = 0x18000, scoped, tag = 'input window, operand 4, single buffered']
    #allocation9 [shape = 's32[1]{0}', space=sflag, size = 0x4, scoped, tag = 'scoped memory for tpu_custom_call.1']
    #allocation10 [shape = 'u8[32768]{0}', space=vmem, size = 0x8000, scoped, tag = 'input window, operand 5, single buffered']
    #allocation11 [shape = 'u8[131072]{0}', space=vmem, size = 0x20000, scoped, tag = 'input window, operand 7, single buffered']
    #allocation12 [shape = 's32[1]{0}', space=sflag, size = 0x4, scoped, tag = 'scoped memory for tpu_custom_call.1']
    #allocation13 [shape = 'u8[16384]{0}', space=vmem, size = 0x4000, scoped, tag = 'output window, operand 0, single buffered']
    %13 = vsyncpa [#allocation3], 0
    %14 = vsyncpa [#allocation6], 0
    %15 = vsyncpa [#allocation9], 0
    %16 = vsyncpa [#allocation12], 0
    %17 = vsyncpa [#allocation4], 0
    // Predicated region
    $region2: #{tpu_custom_call.1} parent=1 // pred_check
      _
    $region3: #{tpu_custom_call.1} parent=1 // pred_check_branch
      %19 = sbr.rel (0) target = $region5
    $region4: #{tpu_custom_call.1} parent=1 // pred_region
      %21 = vsyncadd [#allocation3], 0
      %s22 = sshll.u32 %s0, 4
      %s23 = int_to_ptr.hbm [resolvable:$true] %s22
      %s24 = sshll.u32 [#allocation2], 4
      %s25 = int_to_ptr.vmem [resolvable:$true] %s24
      %30 = dma.hbm_to_vmem [thread:$0]  %s23, 512, %s25, [#allocation3], 128, 128, 8
    $region5: #{tpu_custom_call.1} parent=1 // pred_fallthru
      _
    // Predicated region
    $region6: #{tpu_custom_call.1} parent=1 // pred_check
      _
    $region7: #{tpu_custom_call.1} parent=1 // pred_check_branch
      %32 = sbr.rel (0) target = $region9
    $region8: #{tpu_custom_call.1} parent=1 // pred_region
      %34 = vsyncadd [#allocation6], 0
      %s36 = sshll.u32 %s1, 4
      %s37 = int_to_ptr.hbm [resolvable:$true] %s36
      %s38 = sshll.u32 [#allocation5], 4
      %s39 = int_to_ptr.vmem [resolvable:$true] %s38
      %41 = dma.hbm_to_vmem [thread:$0]  %s37, 16, %s39, [#allocation6]
    $region9: #{tpu_custom_call.1} parent=1 // pred_fallthru
      _
    // Predicated region
    $region10: #{tpu_custom_call.1} parent=1 // pred_check
      _
    $region11: #{tpu_custom_call.1} parent=1 // pred_check_branch
      %43 = sbr.rel (0) target = $region13
    $region12: #{tpu_custom_call.1} parent=1 // pred_region
      _
    $region13: #{tpu_custom_call.1} parent=1 // pred_fallthru
      _
    // Predicated region
    $region14: #{tpu_custom_call.1} parent=1 // pred_check
      _
    $region15: #{tpu_custom_call.1} parent=1 // pred_check_branch
      %45 = sbr.rel (0) target = $region17
    $region16: #{tpu_custom_call.1} parent=1 // pred_region
      %47 = vsyncadd [#allocation6], 0
      %s48 = sshll.u32 %s3, 4
      %s49 = int_to_ptr.hbm [resolvable:$true] %s48
      %s50 = sshll.u32 [#allocation7], 4
      %s51 = int_to_ptr.vmem [resolvable:$true] %s50
      %56 = dma.hbm_to_vmem [thread:$0]  %s49, 2048, %s51, [#allocation6], 128, 128, 8
    $region17: #{tpu_custom_call.1} parent=1 // pred_fallthru
      _
    // Predicated region
    $region18: #{tpu_custom_call.1} parent=1 // pred_check
      _
    $region19: #{tpu_custom_call.1} parent=1 // pred_check_branch
      %58 = sbr.rel (0) target = $region21
    $region20: #{tpu_custom_call.1} parent=1 // pred_region
      %60 = vsyncadd [#allocation9], 0
      %s61 = sshll.u32 %s4, 4
      %s62 = int_to_ptr.hbm [resolvable:$true] %s61
      %s63 = sshll.u32 [#allocation8], 4
      %s64 = int_to_ptr.vmem [resolvable:$true] %s63
      %69 = dma.hbm_to_vmem [thread:$0]  %s62, 3072, %s64, [#allocation9], 192, 192, 12
    $region21: #{tpu_custom_call.1} parent=1 // pred_fallthru
      _
    // Predicated region
    $region22: #{tpu_custom_call.1} parent=1 // pred_check
      _
    $region23: #{tpu_custom_call.1} parent=1 // pred_check_branch
      %71 = sbr.rel (0) target = $region25
    $region24: #{tpu_custom_call.1} parent=1 // pred_region
      %73 = vsyncadd [#allocation9], 0
      %s74 = sshll.u32 %s5, 4
      %s75 = int_to_ptr.hbm [resolvable:$true] %s74
      %s76 = sshll.u32 [#allocation10], 4
      %s77 = int_to_ptr.vmem [resolvable:$true] %s76
      %82 = dma.hbm_to_vmem [thread:$0]  %s75, 1024, %s77, [#allocation9], 64, 64, 4
    $region25: #{tpu_custom_call.1} parent=1 // pred_fallthru
      _
    // Predicated region
    $region26: #{tpu_custom_call.1} parent=1 // pred_check
      _
    $region27: #{tpu_custom_call.1} parent=1 // pred_check_branch
      %84 = sbr.rel (0) target = $region29
    $region28: #{tpu_custom_call.1} parent=1 // pred_region
      _
    $region29: #{tpu_custom_call.1} parent=1 // pred_fallthru
      _
    // Predicated region
    $region30: #{tpu_custom_call.1} parent=1 // pred_check
      _
    $region31: #{tpu_custom_call.1} parent=1 // pred_check_branch
      %86 = sbr.rel (0) target = $region33
    $region32: #{tpu_custom_call.1} parent=1 // pred_region
      %88 = vsyncadd [#allocation12], 0
      %s89 = sshll.u32 %s7, 4
      %s90 = int_to_ptr.hbm [resolvable:$true] %s89
      %s91 = sshll.u32 [#allocation11], 4
      %s92 = int_to_ptr.vmem [resolvable:$true] %s91
      %97 = dma.hbm_to_vmem [thread:$0]  %s90, 4096, %s92, [#allocation12], 128, 128, 8
    $region33: #{tpu_custom_call.1} parent=1 // pred_fallthru
      _
    // Predicated region
    $region34: #{tpu_custom_call.1} parent=1 // pred_check
      _
    $region35: #{tpu_custom_call.1} parent=1 // pred_check_branch
      %99 = sbr.rel (0) target = $region37
    $region36: #{tpu_custom_call.1} parent=1 // pred_region
      %101 = dma.done [#allocation3], 512
    $region37: #{tpu_custom_call.1} parent=1 // pred_fallthru
      _
    // Predicated region
    $region38: #{tpu_custom_call.1} parent=1 // pred_check
      _
    $region39: #{tpu_custom_call.1} parent=1 // pred_check_branch
      %103 = sbr.rel (0) target = $region41
    $region40: #{tpu_custom_call.1} parent=1 // pred_region
      %105 = dma.done [#allocation6], 16
    $region41: #{tpu_custom_call.1} parent=1 // pred_fallthru
      _
    // Predicated region
    $region42: #{tpu_custom_call.1} parent=1 // pred_check
      _
    $region43: #{tpu_custom_call.1} parent=1 // pred_check_branch
      %107 = sbr.rel (0) target = $region45
    $region44: #{tpu_custom_call.1} parent=1 // pred_region
      %109 = dma.done [#allocation6], 2048
    $region45: #{tpu_custom_call.1} parent=1 // pred_fallthru
      _
    // Predicated region
    $region46: #{tpu_custom_call.1} parent=1 // pred_check
      _
    $region47: #{tpu_custom_call.1} parent=1 // pred_check_branch
      %111 = sbr.rel (0) target = $region49
    $region48: #{tpu_custom_call.1} parent=1 // pred_region
      %113 = dma.done [#allocation9], 3072
    $region49: #{tpu_custom_call.1} parent=1 // pred_fallthru
      _
    // Predicated region
    $region50: #{tpu_custom_call.1} parent=1 // pred_check
      _
    $region51: #{tpu_custom_call.1} parent=1 // pred_check_branch
      %115 = sbr.rel (0) target = $region53
    $region52: #{tpu_custom_call.1} parent=1 // pred_region
      %117 = dma.done [#allocation9], 1024
    $region53: #{tpu_custom_call.1} parent=1 // pred_fallthru
      _
    // Predicated region
    $region54: #{tpu_custom_call.1} parent=1 // pred_check
      _
    $region55: #{tpu_custom_call.1} parent=1 // pred_check_branch
      %119 = sbr.rel (0) target = $region57
    $region56: #{tpu_custom_call.1} parent=1 // pred_region
      %121 = dma.done [#allocation12], 4096
    $region57: #{tpu_custom_call.1} parent=1 // pred_fallthru
      _
    %v122 = vld [vmem:[#allocation2] sm:$0xff]
    %v123 = vld [vmem:[#allocation2 + $0x8] sm:$0xff]
    %v124 = vld [vmem:[#allocation2 + $0x10] sm:$0xff]
    %v125 = vld [vmem:[#allocation2 + $0x18] sm:$0xff]
    %v126 = vld [vmem:[#allocation7] sm:$0xff]
    %v127 = vld [vmem:[#allocation7 + $0x8] sm:$0xff]
    %v128 = vld [vmem:[#allocation7 + $0x10] sm:$0xff]
    %v129 = vld [vmem:[#allocation7 + $0x18] sm:$0xff]
    %v130 = vld [vmem:[#allocation7 + $0x20] sm:$0xff]
    %v131 = vld [vmem:[#allocation7 + $0x28] sm:$0xff]
    %v132 = vld [vmem:[#allocation7 + $0x30] sm:$0xff]
    %v133 = vld [vmem:[#allocation7 + $0x38] sm:$0xff]
    %v134 = vld [vmem:[#allocation7 + $0x40] sm:$0xff]
    %v135 = vld [vmem:[#allocation7 + $0x48] sm:$0xff]
    %v136 = vld [vmem:[#allocation7 + $0x50] sm:$0xff]
    %v137 = vld [vmem:[#allocation7 + $0x58] sm:$0xff]
    %v138 = vld [vmem:[#allocation7 + $0x60] sm:$0xff]
    %v139 = vld [vmem:[#allocation7 + $0x68] sm:$0xff]
    %v140 = vld [vmem:[#allocation7 + $0x70] sm:$0xff]
    %v141 = vld [vmem:[#allocation7 + $0x78] sm:$0xff]
    %142 = vmatpush.msra.mxu0 %v141
    %143 = vmatpush.msra.mxu0 %v140
    %144 = vmatpush.msra.mxu0 %v139
    %145 = vmatpush.msra.mxu0 %v138
    %146 = vmatpush.msra.mxu0 %v137
    %147 = vmatpush.msra.mxu0 %v136
    %148 = vmatpush.msra.mxu0 %v135
    %149 = vmatpush.msra.mxu0 %v134
    %150 = vmatpush.msra.mxu0 %v133
    %151 = vmatpush.msra.mxu0 %v132
    %152 = vmatpush.msra.mxu0 %v131
    %153 = vmatpush.msra.mxu0 %v130
    %154 = vmatpush.msra.mxu0 %v129
    %155 = vmatpush.msra.mxu0 %v128
    %156 = vmatpush.msra.mxu0 %v127
    %157 = vmatpush.msra.mxu0 %v126
    %158 = vmatmul.f32.gmra.mxu0 %v122
    %v159 = vpop.f32.mrf.mxu0
    %v160 = vadd.f32 0.0, %v159
    %161 = vmatmul.f32.gmra.mxu0 %v123
    %v162 = vpop.f32.mrf.mxu0
    %v163 = vadd.f32 0.0, %v162
    %164 = vmatmul.f32.gmra.mxu0 %v124
    %v165 = vpop.f32.mrf.mxu0
    %v166 = vadd.f32 0.0, %v165
    %167 = vmatmul.f32.gmra.mxu0 %v125
    %v168 = vpop.f32.mrf.mxu0
    %v169 = vadd.f32 0.0, %v168
    %170 = vdwg.mxu0
    %v171 = vsub.f32 %v122, %v160
    %v172 = vsub.f32 %v123, %v163
    %v173 = vsub.f32 %v124, %v166
    %v174 = vsub.f32 %v125, %v169
    %v175 = vmul.f32 %v171, %v171
    %v176 = vmul.f32 %v172, %v172
    %v177 = vmul.f32 %v173, %v173
    %v178 = vmul.f32 %v174, %v174
    %179 = vmatpush.msra.mxu0 %v141
    %180 = vmatpush.msra.mxu0 %v140
    %181 = vmatpush.msra.mxu0 %v139
    %182 = vmatpush.msra.mxu0 %v138
    %183 = vmatpush.msra.mxu0 %v137
    %184 = vmatpush.msra.mxu0 %v136
    %185 = vmatpush.msra.mxu0 %v135
    %186 = vmatpush.msra.mxu0 %v134
    %187 = vmatpush.msra.mxu0 %v133
    %188 = vmatpush.msra.mxu0 %v132
    %189 = vmatpush.msra.mxu0 %v131
    %190 = vmatpush.msra.mxu0 %v130
    %191 = vmatpush.msra.mxu0 %v129
    %192 = vmatpush.msra.mxu0 %v128
    %193 = vmatpush.msra.mxu0 %v127
    %194 = vmatpush.msra.mxu0 %v126
    %195 = vmatmul.f32.gmra.mxu0 %v175
    %v196 = vpop.f32.mrf.mxu0
    %v197 = vadd.f32 1e-05, %v196
    %198 = vmatmul.f32.gmra.mxu0 %v176
    %v199 = vpop.f32.mrf.mxu0
    %v200 = vadd.f32 1e-05, %v199
    %201 = vmatmul.f32.gmra.mxu0 %v177
    %v202 = vpop.f32.mrf.mxu0
    %v203 = vadd.f32 1e-05, %v202
    %204 = vmatmul.f32.gmra.mxu0 %v178
    %v205 = vpop.f32.mrf.mxu0
    %v206 = vadd.f32 1e-05, %v205
    %207 = vdwg.mxu0
    %v208 = vrsqrt.pop %v197
    %v209 = vmul.f32 %v208, %v197
    %v210 = vmul.f32 %v209, %v208
    %v211 = vmul.f32 0.5, %v210
    %v212 = vsub.f32 1.5, %v211
    %v213 = vmul.f32 %v208, %v212
    %vm214 = vweird.f32 %v197
    %vm215 = vweird.f32 %v208
    %vm216 = vmor %vm214, %vm215
    %v217 = vsel %vm216, %v208, %v213
    %v218 = vrsqrt.pop %v200
    %v219 = vmul.f32 %v218, %v200
    %v220 = vmul.f32 %v219, %v218
    %v221 = vmul.f32 0.5, %v220
    %v222 = vsub.f32 1.5, %v221
    %v223 = vmul.f32 %v218, %v222
    %vm224 = vweird.f32 %v200
    %vm225 = vweird.f32 %v218
    %vm226 = vmor %vm224, %vm225
    %v227 = vsel %vm226, %v218, %v223
    %v228 = vrsqrt.pop %v203
    %v229 = vmul.f32 %v228, %v203
    %v230 = vmul.f32 %v229, %v228
    %v231 = vmul.f32 0.5, %v230
    %v232 = vsub.f32 1.5, %v231
    %v233 = vmul.f32 %v228, %v232
    %vm234 = vweird.f32 %v203
    %vm235 = vweird.f32 %v228
    %vm236 = vmor %vm234, %vm235
    %v237 = vsel %vm236, %v228, %v233
    %v238 = vrsqrt.pop %v206
    %v239 = vmul.f32 %v238, %v206
    %v240 = vmul.f32 %v239, %v238
    %v241 = vmul.f32 0.5, %v240
    %v242 = vsub.f32 1.5, %v241
    %v243 = vmul.f32 %v238, %v242
    %vm244 = vweird.f32 %v206
    %vm245 = vweird.f32 %v238
    %vm246 = vmor %vm244, %vm245
    %v247 = vsel %vm246, %v238, %v243
    %v248 = vmul.f32 %v171, %v217
    %v249 = vmul.f32 %v172, %v227
    %v250 = vmul.f32 %v173, %v237
    %v251 = vmul.f32 %v174, %v247
    %v252 = vld [vmem:[#allocation5] sm:$0x1]
    %v254 = vperm.slane %v252, 0
    %v256 = vmul.f32 %v248, %v254
    %v257 = vmul.f32 %v249, %v254
    %v258 = vmul.f32 %v250, %v254
    %v259 = vmul.f32 %v251, %v254
    %v260 = vld [vmem:[%s2] sm:$0x1]
    %v262 = vperm.slane %v260, 0
    %v264 = vadd.f32 %v256, %v262
    %v265 = vadd.f32 %v257, %v262
    %v266 = vadd.f32 %v258, %v262
    %v267 = vadd.f32 %v259, %v262
    %v268 = vpack.c.bf16 %v265, %v264
    %v269 = vpack.c.bf16 %v267, %v266
    %v270 = vld [vmem:[#allocation8] sm:$0xff]
    %v271 = vld [vmem:[#allocation8 + $0x8] sm:$0xf]
    %v272 = vld [vmem:[#allocation8 + $0xc] sm:$0xff]
    %v273 = vld [vmem:[#allocation8 + $0x14] sm:$0xf]
    %v274 = vld [vmem:[#allocation8 + $0x18] sm:$0xff]
    %v275 = vld [vmem:[#allocation8 + $0x20] sm:$0xf]
    %v276 = vld [vmem:[#allocation8 + $0x24] sm:$0xff]
    %v277 = vld [vmem:[#allocation8 + $0x2c] sm:$0xf]
    %v278 = vld [vmem:[#allocation8 + $0x30] sm:$0xff]
    %v279 = vld [vmem:[#allocation8 + $0x38] sm:$0xf]
    %v280 = vld [vmem:[#allocation8 + $0x3c] sm:$0xff]
    %v281 = vld [vmem:[#allocation8 + $0x44] sm:$0xf]
    %v282 = vld [vmem:[#allocation8 + $0x48] sm:$0xff]
    %v283 = vld [vmem:[#allocation8 + $0x50] sm:$0xf]
    %v284 = vld [vmem:[#allocation8 + $0x54] sm:$0xff]
    %v285 = vld [vmem:[#allocation8 + $0x5c] sm:$0xf]
    %v286 = vld [vmem:[#allocation8 + $0x60] sm:$0xff]
    %v287 = vld [vmem:[#allocation8 + $0x68] sm:$0xf]
    %v288 = vld [vmem:[#allocation8 + $0x6c] sm:$0xff]
    %v289 = vld [vmem:[#allocation8 + $0x74] sm:$0xf]
    %v290 = vld [vmem:[#allocation8 + $0x78] sm:$0xff]
    %v291 = vld [vmem:[#allocation8 + $0x80] sm:$0xf]
    %v292 = vld [vmem:[#allocation8 + $0x84] sm:$0xff]
    %v293 = vld [vmem:[#allocation8 + $0x8c] sm:$0xf]
    %v294 = vld [vmem:[#allocation8 + $0x90] sm:$0xff]
    %v295 = vld [vmem:[#allocation8 + $0x98] sm:$0xf]
    %v296 = vld [vmem:[#allocation8 + $0x9c] sm:$0xff]
    %v297 = vld [vmem:[#allocation8 + $0xa4] sm:$0xf]
    %v298 = vld [vmem:[#allocation8 + $0xa8] sm:$0xff]
    %v299 = vld [vmem:[#allocation8 + $0xb0] sm:$0xf]
    %v300 = vld [vmem:[#allocation8 + $0xb4] sm:$0xff]
    %v301 = vld [vmem:[#allocation8 + $0xbc] sm:$0xf]
    %v334 = vunpack.c.l.b16 %v270
    %v335 = vunpack.c.h.b16 %v270
    %v336 = vunpack.c.l.b16 %v271
    %v337 = vunpack.c.l.b16 %v272
    %v338 = vunpack.c.h.b16 %v272
    %v339 = vunpack.c.l.b16 %v273
    %v340 = vunpack.c.l.b16 %v274
    %v341 = vunpack.c.h.b16 %v274
    %v342 = vunpack.c.l.b16 %v275
    %v343 = vunpack.c.l.b16 %v276
    %v344 = vunpack.c.h.b16 %v276
    %v345 = vunpack.c.l.b16 %v277
    %v346 = vunpack.c.l.b16 %v278
    %v347 = vunpack.c.h.b16 %v278
    %v348 = vunpack.c.l.b16 %v279
    %v349 = vunpack.c.l.b16 %v280
    %v350 = vunpack.c.h.b16 %v280
    %v351 = vunpack.c.l.b16 %v281
    %v352 = vunpack.c.l.b16 %v282
    %v353 = vunpack.c.h.b16 %v282
    %v354 = vunpack.c.l.b16 %v283
    %v355 = vunpack.c.l.b16 %v284
    %v356 = vunpack.c.h.b16 %v284
    %v357 = vunpack.c.l.b16 %v285
    %v358 = vunpack.c.l.b16 %v286
    %v359 = vunpack.c.h.b16 %v286
    %v360 = vunpack.c.l.b16 %v287
    %v361 = vunpack.c.l.b16 %v288
    %v362 = vunpack.c.h.b16 %v288
    %v363 = vunpack.c.l.b16 %v289
    %v364 = vunpack.c.l.b16 %v290
    %v365 = vunpack.c.h.b16 %v290
    %v366 = vunpack.c.l.b16 %v291
    %v367 = vunpack.c.l.b16 %v292
    %v368 = vunpack.c.h.b16 %v292
    %v369 = vunpack.c.l.b16 %v293
    %v370 = vunpack.c.l.b16 %v294
    %v371 = vunpack.c.h.b16 %v294
    %v372 = vunpack.c.l.b16 %v295
    %v373 = vunpack.c.l.b16 %v296
    %v374 = vunpack.c.h.b16 %v296
    %v375 = vunpack.c.l.b16 %v297
    %v376 = vunpack.c.l.b16 %v298
    %v377 = vunpack.c.h.b16 %v298
    %v378 = vunpack.c.l.b16 %v299
    %v379 = vunpack.c.l.b16 %v300
    %v380 = vunpack.c.h.b16 %v300
    %v381 = vunpack.c.l.b16 %v301
    %v382 = vpack.c.b16 %v337, %v334
    %v383 = vpack.c.b16 %v338, %v335
    %v384 = vpack.c.b16 %v339, %v336
    %v385 = vpack.c.b16 %v343, %v340
    %v386 = vpack.c.b16 %v344, %v341
    %v387 = vpack.c.b16 %v345, %v342
    %v388 = vpack.c.b16 %v349, %v346
    %v389 = vpack.c.b16 %v350, %v347
    %v390 = vpack.c.b16 %v351, %v348
    %v391 = vpack.c.b16 %v355, %v352
    %v392 = vpack.c.b16 %v356, %v353
    %v393 = vpack.c.b16 %v357, %v354
    %v394 = vpack.c.b16 %v361, %v358
    %v395 = vpack.c.b16 %v362, %v359
    %v396 = vpack.c.b16 %v363, %v360
    %v397 = vpack.c.b16 %v367, %v364
    %v398 = vpack.c.b16 %v368, %v365
    %v399 = vpack.c.b16 %v369, %v366
    %v400 = vpack.c.b16 %v373, %v370
    %v401 = vpack.c.b16 %v374, %v371
    %v402 = vpack.c.b16 %v375, %v372
    %v403 = vpack.c.b16 %v379, %v376
    %v404 = vpack.c.b16 %v380, %v377
    %v405 = vpack.c.b16 %v381, %v378
    %430 = vmatpush.bf16.msra.mxu0 %v403
    %431 = vmatpush.bf16.msra.mxu0 %v400
    %432 = vmatpush.bf16.msra.mxu0 %v397
    %433 = vmatpush.bf16.msra.mxu0 %v394
    %434 = vmatpush.bf16.msra.mxu0 %v391
    %435 = vmatpush.bf16.msra.mxu0 %v388
    %436 = vmatpush.bf16.msra.mxu0 %v385
    %437 = vmatpush.bf16.msra.mxu0 %v382
    %438 = vmatmul.bf16.gmra.mxu0 %v268
    %v439 = vpop.f32.mrf.mxu0
    %v440 = vadd.f32 0.0, %v439
    %v441 = vpop.f32.mrf.mxu0
    %v442 = vadd.f32 0.0, %v441
    %443 = vmatmul.bf16.gmra.mxu0 %v269
    %v444 = vpop.f32.mrf.mxu0
    %v445 = vadd.f32 0.0, %v444
    %v446 = vpop.f32.mrf.mxu0
    %v447 = vadd.f32 0.0, %v446
    %448 = vdwg.mxu0
    %449 = vmatpush.bf16.msra.mxu0 %v404
    %450 = vmatpush.bf16.msra.mxu0 %v401
    %451 = vmatpush.bf16.msra.mxu0 %v398
    %452 = vmatpush.bf16.msra.mxu0 %v395
    %453 = vmatpush.bf16.msra.mxu0 %v392
    %454 = vmatpush.bf16.msra.mxu0 %v389
    %455 = vmatpush.bf16.msra.mxu0 %v386
    %456 = vmatpush.bf16.msra.mxu0 %v383
    %457 = vmatmul.bf16.gmra.mxu0 %v268
    %v458 = vpop.f32.mrf.mxu0
    %v459 = vadd.f32 0.0, %v458
    %v460 = vpop.f32.mrf.mxu0
    %v461 = vadd.f32 0.0, %v460
    %462 = vmatmul.bf16.gmra.mxu0 %v269
    %v463 = vpop.f32.mrf.mxu0
    %v464 = vadd.f32 0.0, %v463
    %v465 = vpop.f32.mrf.mxu0
    %v466 = vadd.f32 0.0, %v465
    %467 = vdwg.mxu0
    %468 = vmatpush.bf16.msra.mxu0 %v405
    %469 = vmatpush.bf16.msra.mxu0 %v402
    %470 = vmatpush.bf16.msra.mxu0 %v399
    %471 = vmatpush.bf16.msra.mxu0 %v396
    %472 = vmatpush.bf16.msra.mxu0 %v393
    %473 = vmatpush.bf16.msra.mxu0 %v390
    %474 = vmatpush.bf16.msra.mxu0 %v387
    %475 = vmatpush.bf16.msra.mxu0 %v384
    %476 = vmatmul.bf16.gmra.mxu0 %v268
    %v477 = vpop.f32.mrf.mxu0
    %v478 = vadd.f32 0.0, %v477
    %v479 = vpop.f32.mrf.mxu0
    %v480 = vadd.f32 0.0, %v479
    %481 = vmatmul.bf16.gmra.mxu0 %v269
    %v482 = vpop.f32.mrf.mxu0
    %v483 = vadd.f32 0.0, %v482
    %v484 = vpop.f32.mrf.mxu0
    %v485 = vadd.f32 0.0, %v484
    %486 = vdwg.mxu0
    %v487 = vld [vmem:[#allocation11] sm:$0xff]
    %v488 = vld [vmem:[#allocation11 + $0x8] sm:$0xff]
    %v489 = vld [vmem:[#allocation11 + $0x10] sm:$0xff]
    %v490 = vld [vmem:[#allocation11 + $0x18] sm:$0xff]
    %v491 = vld [vmem:[#allocation11 + $0x20] sm:$0xff]
    %v492 = vld [vmem:[#allocation11 + $0x28] sm:$0xff]
    %v493 = vld [vmem:[#allocation11 + $0x30] sm:$0xff]
    %v494 = vld [vmem:[#allocation11 + $0x38] sm:$0xff]
    %v495 = vld [vmem:[#allocation11 + $0x40] sm:$0xff]
    %v496 = vld [vmem:[#allocation11 + $0x48] sm:$0xff]
    %v497 = vld [vmem:[#allocation11 + $0x50] sm:$0xff]
    %v498 = vld [vmem:[#allocation11 + $0x58] sm:$0xff]
    %v499 = vld [vmem:[#allocation11 + $0x60] sm:$0xff]
    %v500 = vld [vmem:[#allocation11 + $0x68] sm:$0xff]
    %v501 = vld [vmem:[#allocation11 + $0x70] sm:$0xff]
    %v502 = vld [vmem:[#allocation11 + $0x78] sm:$0xff]
    %v503 = vld [vmem:[#allocation11 + $0x80] sm:$0xff]
    %v504 = vld [vmem:[#allocation11 + $0x88] sm:$0xff]
    %v505 = vld [vmem:[#allocation11 + $0x90] sm:$0xff]
    %v506 = vld [vmem:[#allocation11 + $0x98] sm:$0xff]
    %v507 = vld [vmem:[#allocation11 + $0xa0] sm:$0xff]
    %v508 = vld [vmem:[#allocation11 + $0xa8] sm:$0xff]
    %v509 = vld [vmem:[#allocation11 + $0xb0] sm:$0xff]
    %v510 = vld [vmem:[#allocation11 + $0xb8] sm:$0xff]
    %v511 = vld [vmem:[#allocation11 + $0xc0] sm:$0xff]
    %v512 = vld [vmem:[#allocation11 + $0xc8] sm:$0xff]
    %v513 = vld [vmem:[#allocation11 + $0xd0] sm:$0xff]
    %v514 = vld [vmem:[#allocation11 + $0xd8] sm:$0xff]
    %v515 = vld [vmem:[#allocation11 + $0xe0] sm:$0xff]
    %v516 = vld [vmem:[#allocation11 + $0xe8] sm:$0xff]
    %v517 = vld [vmem:[#allocation11 + $0xf0] sm:$0xff]
    %v518 = vld [vmem:[#allocation11 + $0xf8] sm:$0xff]
    %v519 = vpack.c.bf16 %v440, %v440
    %v520 = vpack.c.bf16 %v442, %v442
    %v521 = vpack.c.bf16 %v445, %v445
    %v522 = vpack.c.bf16 %v447, %v447
    %v523 = vmul.f32 %v459, %v487
    %v524 = vmul.f32 %v461, %v488
    %v525 = vmul.f32 %v459, %v489
    %v526 = vmul.f32 %v461, %v490
    %v527 = vmul.f32 %v459, %v491
    %v528 = vmul.f32 %v461, %v492
    %v529 = vmul.f32 %v459, %v493
    %v530 = vmul.f32 %v461, %v494
    %v531 = vmul.f32 %v459, %v495
    %v532 = vmul.f32 %v461, %v496
    %v533 = vmul.f32 %v459, %v497
    %v534 = vmul.f32 %v461, %v498
    %v535 = vmul.f32 %v459, %v499
    %v536 = vmul.f32 %v461, %v500
    %v537 = vmul.f32 %v459, %v501
    %v538 = vmul.f32 %v461, %v502
    %v539 = vmul.f32 %v459, %v503
    %v540 = vmul.f32 %v461, %v504
    %v541 = vmul.f32 %v459, %v505
    %v542 = vmul.f32 %v461, %v506
    %v543 = vmul.f32 %v459, %v507
    %v544 = vmul.f32 %v461, %v508
    %v545 = vmul.f32 %v459, %v509
    %v546 = vmul.f32 %v461, %v510
    %v547 = vmul.f32 %v459, %v511
    %v548 = vmul.f32 %v461, %v512
    %v549 = vmul.f32 %v459, %v513
    %v550 = vmul.f32 %v461, %v514
    %v551 = vmul.f32 %v459, %v515
    %v552 = vmul.f32 %v461, %v516
    %v553 = vmul.f32 %v459, %v517
    %v554 = vmul.f32 %v461, %v518
    %v555 = vmul.f32 %v464, %v487
    %v556 = vmul.f32 %v466, %v488
    %v557 = vmul.f32 %v464, %v489
    %v558 = vmul.f32 %v466, %v490
    %v559 = vmul.f32 %v464, %v491
    %v560 = vmul.f32 %v466, %v492
    %v561 = vmul.f32 %v464, %v493
    %v562 = vmul.f32 %v466, %v494
    %v563 = vmul.f32 %v464, %v495
    %v564 = vmul.f32 %v466, %v496
    %v565 = vmul.f32 %v464, %v497
    %v566 = vmul.f32 %v466, %v498
    %v567 = vmul.f32 %v464, %v499
    %v568 = vmul.f32 %v466, %v500
    %v569 = vmul.f32 %v464, %v501
    %v570 = vmul.f32 %v466, %v502
    %v571 = vmul.f32 %v464, %v503
    %v572 = vmul.f32 %v466, %v504
    %v573 = vmul.f32 %v464, %v505
    %v574 = vmul.f32 %v466, %v506
    %v575 = vmul.f32 %v464, %v507
    %v576 = vmul.f32 %v466, %v508
    %v577 = vmul.f32 %v464, %v509
    %v578 = vmul.f32 %v466, %v510
    %v579 = vmul.f32 %v464, %v511
    %v580 = vmul.f32 %v466, %v512
    %v581 = vmul.f32 %v464, %v513
    %v582 = vmul.f32 %v466, %v514
    %v583 = vmul.f32 %v464, %v515
    %v584 = vmul.f32 %v466, %v516
    %v585 = vmul.f32 %v464, %v517
    %v586 = vmul.f32 %v466, %v518
    %v587 = vpack.c.bf16 %v523, %v523
    %v588 = vpack.c.bf16 %v524, %v524
    %v589 = vpack.c.bf16 %v525, %v525
    %v590 = vpack.c.bf16 %v526, %v526
    %v591 = vpack.c.bf16 %v527, %v527
    %v592 = vpack.c.bf16 %v528, %v528
    %v593 = vpack.c.bf16 %v529, %v529
    %v594 = vpack.c.bf16 %v530, %v530
    %v595 = vpack.c.bf16 %v531, %v531
    %v596 = vpack.c.bf16 %v532, %v532
    %v597 = vpack.c.bf16 %v533, %v533
    %v598 = vpack.c.bf16 %v534, %v534
    %v599 = vpack.c.bf16 %v535, %v535
    %v600 = vpack.c.bf16 %v536, %v536
    %v601 = vpack.c.bf16 %v537, %v537
    %v602 = vpack.c.bf16 %v538, %v538
    %v603 = vpack.c.bf16 %v539, %v539
    %v604 = vpack.c.bf16 %v540, %v540
    %v605 = vpack.c.bf16 %v541, %v541
    %v606 = vpack.c.bf16 %v542, %v542
    %v607 = vpack.c.bf16 %v543, %v543
    %v608 = vpack.c.bf16 %v544, %v544
    %v609 = vpack.c.bf16 %v545, %v545
    %v610 = vpack.c.bf16 %v546, %v546
    %v611 = vpack.c.bf16 %v547, %v547
    %v612 = vpack.c.bf16 %v548, %v548
    %v613 = vpack.c.bf16 %v549, %v549
    %v614 = vpack.c.bf16 %v550, %v550
    %v615 = vpack.c.bf16 %v551, %v551
    %v616 = vpack.c.bf16 %v552, %v552
    %v617 = vpack.c.bf16 %v553, %v553
    %v618 = vpack.c.bf16 %v554, %v554
    %v619 = vpack.c.bf16 %v555, %v555
    %v620 = vpack.c.bf16 %v556, %v556
    %v621 = vpack.c.bf16 %v557, %v557
    %v622 = vpack.c.bf16 %v558, %v558
    %v623 = vpack.c.bf16 %v559, %v559
    %v624 = vpack.c.bf16 %v560, %v560
    %v625 = vpack.c.bf16 %v561, %v561
    %v626 = vpack.c.bf16 %v562, %v562
    %v627 = vpack.c.bf16 %v563, %v563
    %v628 = vpack.c.bf16 %v564, %v564
    %v629 = vpack.c.bf16 %v565, %v565
    %v630 = vpack.c.bf16 %v566, %v566
    %v631 = vpack.c.bf16 %v567, %v567
    %v632 = vpack.c.bf16 %v568, %v568
    %v633 = vpack.c.bf16 %v569, %v569
    %v634 = vpack.c.bf16 %v570, %v570
    %v635 = vpack.c.bf16 %v571, %v571
    %v636 = vpack.c.bf16 %v572, %v572
    %v637 = vpack.c.bf16 %v573, %v573
    %v638 = vpack.c.bf16 %v574, %v574
    %v639 = vpack.c.bf16 %v575, %v575
    %v640 = vpack.c.bf16 %v576, %v576
    %v641 = vpack.c.bf16 %v577, %v577
    %v642 = vpack.c.bf16 %v578, %v578
    %v643 = vpack.c.bf16 %v579, %v579
    %v644 = vpack.c.bf16 %v580, %v580
    %v645 = vpack.c.bf16 %v581, %v581
    %v646 = vpack.c.bf16 %v582, %v582
    %v647 = vpack.c.bf16 %v583, %v583
    %v648 = vpack.c.bf16 %v584, %v584
    %v649 = vpack.c.bf16 %v585, %v585
    %v650 = vpack.c.bf16 %v586, %v586
    %v651 = vmul.f32 %v478, %v487
    %v652 = vmul.f32 %v480, %v488
    %v653 = vmul.f32 %v478, %v489
    %v654 = vmul.f32 %v480, %v490
    %v655 = vmul.f32 %v478, %v491
    %v656 = vmul.f32 %v480, %v492
    %v657 = vmul.f32 %v478, %v493
    %v658 = vmul.f32 %v480, %v494
    %v659 = vmul.f32 %v478, %v495
    %v660 = vmul.f32 %v480, %v496
    %v661 = vmul.f32 %v478, %v497
    %v662 = vmul.f32 %v480, %v498
    %v663 = vmul.f32 %v478, %v499
    %v664 = vmul.f32 %v480, %v500
    %v665 = vmul.f32 %v478, %v501
    %v666 = vmul.f32 %v480, %v502
    %v667 = vmul.f32 %v478, %v503
    %v668 = vmul.f32 %v480, %v504
    %v669 = vmul.f32 %v478, %v505
    %v670 = vmul.f32 %v480, %v506
    %v671 = vmul.f32 %v478, %v507
    %v672 = vmul.f32 %v480, %v508
    %v673 = vmul.f32 %v478, %v509
    %v674 = vmul.f32 %v480, %v510
    %v675 = vmul.f32 %v478, %v511
    %v676 = vmul.f32 %v480, %v512
    %v677 = vmul.f32 %v478, %v513
    %v678 = vmul.f32 %v480, %v514
    %v679 = vmul.f32 %v478, %v515
    %v680 = vmul.f32 %v480, %v516
    %v681 = vmul.f32 %v478, %v517
    %v682 = vmul.f32 %v480, %v518
    %v683 = vmul.f32 %v483, %v487
    %v684 = vmul.f32 %v485, %v488
    %v685 = vmul.f32 %v483, %v489
    %v686 = vmul.f32 %v485, %v490
    %v687 = vmul.f32 %v483, %v491
    %v688 = vmul.f32 %v485, %v492
    %v689 = vmul.f32 %v483, %v493
    %v690 = vmul.f32 %v485, %v494
    %v691 = vmul.f32 %v483, %v495
    %v692 = vmul.f32 %v485, %v496
    %v693 = vmul.f32 %v483, %v497
    %v694 = vmul.f32 %v485, %v498
    %v695 = vmul.f32 %v483, %v499
    %v696 = vmul.f32 %v485, %v500
    %v697 = vmul.f32 %v483, %v501
    %v698 = vmul.f32 %v485, %v502
    %v699 = vmul.f32 %v483, %v503
    %v700 = vmul.f32 %v485, %v504
    %v701 = vmul.f32 %v483, %v505
    %v702 = vmul.f32 %v485, %v506
    %v703 = vmul.f32 %v483, %v507
    %v704 = vmul.f32 %v485, %v508
    %v705 = vmul.f32 %v483, %v509
    %v706 = vmul.f32 %v485, %v510
    %v707 = vmul.f32 %v483, %v511
    %v708 = vmul.f32 %v485, %v512
    %v709 = vmul.f32 %v483, %v513
    %v710 = vmul.f32 %v485, %v514
    %v711 = vmul.f32 %v483, %v515
    %v712 = vmul.f32 %v485, %v516
    %v713 = vmul.f32 %v483, %v517
    %v714 = vmul.f32 %v485, %v518
    %v715 = vpack.c.bf16 %v651, %v651
    %v716 = vpack.c.bf16 %v652, %v652
    %v717 = vpack.c.bf16 %v653, %v653
    %v718 = vpack.c.bf16 %v654, %v654
    %v719 = vpack.c.bf16 %v655, %v655
    %v720 = vpack.c.bf16 %v656, %v656
    %v721 = vpack.c.bf16 %v657, %v657
    %v722 = vpack.c.bf16 %v658, %v658
    %v723 = vpack.c.bf16 %v659, %v659
    %v724 = vpack.c.bf16 %v660, %v660
    %v725 = vpack.c.bf16 %v661, %v661
    %v726 = vpack.c.bf16 %v662, %v662
    %v727 = vpack.c.bf16 %v663, %v663
    %v728 = vpack.c.bf16 %v664, %v664
    %v729 = vpack.c.bf16 %v665, %v665
    %v730 = vpack.c.bf16 %v666, %v666
    %v731 = vpack.c.bf16 %v667, %v667
    %v732 = vpack.c.bf16 %v668, %v668
    %v733 = vpack.c.bf16 %v669, %v669
    %v734 = vpack.c.bf16 %v670, %v670
    %v735 = vpack.c.bf16 %v671, %v671
    %v736 = vpack.c.bf16 %v672, %v672
    %v737 = vpack.c.bf16 %v673, %v673
    %v738 = vpack.c.bf16 %v674, %v674
    %v739 = vpack.c.bf16 %v675, %v675
    %v740 = vpack.c.bf16 %v676, %v676
    %v741 = vpack.c.bf16 %v677, %v677
    %v742 = vpack.c.bf16 %v678, %v678
    %v743 = vpack.c.bf16 %v679, %v679
    %v744 = vpack.c.bf16 %v680, %v680
    %v745 = vpack.c.bf16 %v681, %v681
    %v746 = vpack.c.bf16 %v682, %v682
    %v747 = vpack.c.bf16 %v683, %v683
    %v748 = vpack.c.bf16 %v684, %v684
    %v749 = vpack.c.bf16 %v685, %v685
    %v750 = vpack.c.bf16 %v686, %v686
    %v751 = vpack.c.bf16 %v687, %v687
    %v752 = vpack.c.bf16 %v688, %v688
    %v753 = vpack.c.bf16 %v689, %v689
    %v754 = vpack.c.bf16 %v690, %v690
    %v755 = vpack.c.bf16 %v691, %v691
    %v756 = vpack.c.bf16 %v692, %v692
    %v757 = vpack.c.bf16 %v693, %v693
    %v758 = vpack.c.bf16 %v694, %v694
    %v759 = vpack.c.bf16 %v695, %v695
    %v760 = vpack.c.bf16 %v696, %v696
    %v761 = vpack.c.bf16 %v697, %v697
    %v762 = vpack.c.bf16 %v698, %v698
    %v763 = vpack.c.bf16 %v699, %v699
    %v764 = vpack.c.bf16 %v700, %v700
    %v765 = vpack.c.bf16 %v701, %v701
    %v766 = vpack.c.bf16 %v702, %v702
    %v767 = vpack.c.bf16 %v703, %v703
    %v768 = vpack.c.bf16 %v704, %v704
    %v769 = vpack.c.bf16 %v705, %v705
    %v770 = vpack.c.bf16 %v706, %v706
    %v771 = vpack.c.bf16 %v707, %v707
    %v772 = vpack.c.bf16 %v708, %v708
    %v773 = vpack.c.bf16 %v709, %v709
    %v774 = vpack.c.bf16 %v710, %v710
    %v775 = vpack.c.bf16 %v711, %v711
    %v776 = vpack.c.bf16 %v712, %v712
    %v777 = vpack.c.bf16 %v713, %v713
    %v778 = vpack.c.bf16 %v714, %v714
    %v781 = vunpack.c.l.b16 %v519
    %v782 = vunpack.c.l.b16 %v520
    %v783 = vpack.c.b16 %v782, %v781
    %v817 = vunpack.c.l.b16 %v587
    %v818 = vunpack.c.l.b16 %v588
    %v819 = vunpack.c.l.b16 %v589
    %v820 = vunpack.c.l.b16 %v590
    %v821 = vunpack.c.l.b16 %v591
    %v822 = vunpack.c.l.b16 %v592
    %v823 = vunpack.c.l.b16 %v593
    %v824 = vunpack.c.l.b16 %v594
    %v825 = vunpack.c.l.b16 %v595
    %v826 = vunpack.c.l.b16 %v596
    %v827 = vunpack.c.l.b16 %v597
    %v828 = vunpack.c.l.b16 %v598
    %v829 = vunpack.c.l.b16 %v599
    %v830 = vunpack.c.l.b16 %v600
    %v831 = vunpack.c.l.b16 %v601
    %v832 = vunpack.c.l.b16 %v602
    %v833 = vunpack.c.l.b16 %v603
    %v834 = vunpack.c.l.b16 %v604
    %v835 = vunpack.c.l.b16 %v605
    %v836 = vunpack.c.l.b16 %v606
    %v837 = vunpack.c.l.b16 %v607
    %v838 = vunpack.c.l.b16 %v608
    %v839 = vunpack.c.l.b16 %v609
    %v840 = vunpack.c.l.b16 %v610
    %v841 = vunpack.c.l.b16 %v611
    %v842 = vunpack.c.l.b16 %v612
    %v843 = vunpack.c.l.b16 %v613
    %v844 = vunpack.c.l.b16 %v614
    %v845 = vunpack.c.l.b16 %v615
    %v846 = vunpack.c.l.b16 %v616
    %v847 = vunpack.c.l.b16 %v617
    %v848 = vunpack.c.l.b16 %v618
    %v849 = vpack.c.b16 %v818, %v817
    %v850 = vpack.c.b16 %v820, %v819
    %v851 = vpack.c.b16 %v822, %v821
    %v852 = vpack.c.b16 %v824, %v823
    %v853 = vpack.c.b16 %v826, %v825
    %v854 = vpack.c.b16 %v828, %v827
    %v855 = vpack.c.b16 %v830, %v829
    %v856 = vpack.c.b16 %v832, %v831
    %v857 = vpack.c.b16 %v834, %v833
    %v858 = vpack.c.b16 %v836, %v835
    %v859 = vpack.c.b16 %v838, %v837
    %v860 = vpack.c.b16 %v840, %v839
    %v861 = vpack.c.b16 %v842, %v841
    %v862 = vpack.c.b16 %v844, %v843
    %v863 = vpack.c.b16 %v846, %v845
    %v864 = vpack.c.b16 %v848, %v847
    %881 = vmatpush.bf16.xpose.msra.mxu0 %v856
    %882 = vmatpush.bf16.xpose.msra.mxu0 %v855
    %883 = vmatpush.bf16.xpose.msra.mxu0 %v854
    %884 = vmatpush.bf16.xpose.msra.mxu0 %v853
    %885 = vmatpush.bf16.xpose.msra.mxu0 %v852
    %886 = vmatpush.bf16.xpose.msra.mxu0 %v851
    %887 = vmatpush.bf16.xpose.msra.mxu0 %v850
    %888 = vmatpush.bf16.xpose.msra.mxu0 %v849
    %889 = vmatmul.bf16.gmra.mxu0 %v783
    %v890 = vpop.f32.mrf.mxu0
    %v891 = vadd.f32 0.0, %v890
    %v892 = vpop.f32.mrf.mxu0
    %v893 = vadd.f32 0.0, %v892
    %894 = vdwg.mxu0
    %895 = vmatpush.bf16.xpose.msra.mxu0 %v864
    %896 = vmatpush.bf16.xpose.msra.mxu0 %v863
    %897 = vmatpush.bf16.xpose.msra.mxu0 %v862
    %898 = vmatpush.bf16.xpose.msra.mxu0 %v861
    %899 = vmatpush.bf16.xpose.msra.mxu0 %v860
    %900 = vmatpush.bf16.xpose.msra.mxu0 %v859
    %901 = vmatpush.bf16.xpose.msra.mxu0 %v858
    %902 = vmatpush.bf16.xpose.msra.mxu0 %v857
    %903 = vmatmul.bf16.gmra.mxu0 %v783
    %v904 = vpop.f32.mrf.mxu0
    %v905 = vadd.f32 0.0, %v904
    %v906 = vpop.f32.mrf.mxu0
    %v907 = vadd.f32 0.0, %v906
    %908 = vdwg.mxu0
    %v911 = vunpack.c.l.b16 %v521
    %v912 = vunpack.c.l.b16 %v522
    %v913 = vpack.c.b16 %v912, %v911
    %v947 = vunpack.c.l.b16 %v619
    %v948 = vunpack.c.l.b16 %v620
    %v949 = vunpack.c.l.b16 %v621
    %v950 = vunpack.c.l.b16 %v622
    %v951 = vunpack.c.l.b16 %v623
    %v952 = vunpack.c.l.b16 %v624
    %v953 = vunpack.c.l.b16 %v625
    %v954 = vunpack.c.l.b16 %v626
    %v955 = vunpack.c.l.b16 %v627
    %v956 = vunpack.c.l.b16 %v628
    %v957 = vunpack.c.l.b16 %v629
    %v958 = vunpack.c.l.b16 %v630
    %v959 = vunpack.c.l.b16 %v631
    %v960 = vunpack.c.l.b16 %v632
    %v961 = vunpack.c.l.b16 %v633
    %v962 = vunpack.c.l.b16 %v634
    %v963 = vunpack.c.l.b16 %v635
    %v964 = vunpack.c.l.b16 %v636
    %v965 = vunpack.c.l.b16 %v637
    %v966 = vunpack.c.l.b16 %v638
    %v967 = vunpack.c.l.b16 %v639
    %v968 = vunpack.c.l.b16 %v640
    %v969 = vunpack.c.l.b16 %v641
    %v970 = vunpack.c.l.b16 %v642
    %v971 = vunpack.c.l.b16 %v643
    %v972 = vunpack.c.l.b16 %v644
    %v973 = vunpack.c.l.b16 %v645
    %v974 = vunpack.c.l.b16 %v646
    %v975 = vunpack.c.l.b16 %v647
    %v976 = vunpack.c.l.b16 %v648
    %v977 = vunpack.c.l.b16 %v649
    %v978 = vunpack.c.l.b16 %v650
    %v979 = vpack.c.b16 %v948, %v947
    %v980 = vpack.c.b16 %v950, %v949
    %v981 = vpack.c.b16 %v952, %v951
    %v982 = vpack.c.b16 %v954, %v953
    %v983 = vpack.c.b16 %v956, %v955
    %v984 = vpack.c.b16 %v958, %v957
    %v985 = vpack.c.b16 %v960, %v959
    %v986 = vpack.c.b16 %v962, %v961
    %v987 = vpack.c.b16 %v964, %v963
    %v988 = vpack.c.b16 %v966, %v965
    %v989 = vpack.c.b16 %v968, %v967
    %v990 = vpack.c.b16 %v970, %v969
    %v991 = vpack.c.b16 %v972, %v971
    %v992 = vpack.c.b16 %v974, %v973
    %v993 = vpack.c.b16 %v976, %v975
    %v994 = vpack.c.b16 %v978, %v977
    %1011 = vmatpush.bf16.xpose.msra.mxu0 %v986
    %1012 = vmatpush.bf16.xpose.msra.mxu0 %v985
    %1013 = vmatpush.bf16.xpose.msra.mxu0 %v984
    %1014 = vmatpush.bf16.xpose.msra.mxu0 %v983
    %1015 = vmatpush.bf16.xpose.msra.mxu0 %v982
    %1016 = vmatpush.bf16.xpose.msra.mxu0 %v981
    %1017 = vmatpush.bf16.xpose.msra.mxu0 %v980
    %1018 = vmatpush.bf16.xpose.msra.mxu0 %v979
    %1019 = vmatmul.bf16.gmra.mxu0 %v913
    %v1020 = vpop.f32.mrf.mxu0
    %v1021 = vadd.f32 0.0, %v1020
    %v1022 = vpop.f32.mrf.mxu0
    %v1023 = vadd.f32 0.0, %v1022
    %1024 = vdwg.mxu0
    %1025 = vmatpush.bf16.xpose.msra.mxu0 %v994
    %1026 = vmatpush.bf16.xpose.msra.mxu0 %v993
    %1027 = vmatpush.bf16.xpose.msra.mxu0 %v992
    %1028 = vmatpush.bf16.xpose.msra.mxu0 %v991
    %1029 = vmatpush.bf16.xpose.msra.mxu0 %v990
    %1030 = vmatpush.bf16.xpose.msra.mxu0 %v989
    %1031 = vmatpush.bf16.xpose.msra.mxu0 %v988
    %1032 = vmatpush.bf16.xpose.msra.mxu0 %v987
    %1033 = vmatmul.bf16.gmra.mxu0 %v913
    %v1034 = vpop.f32.mrf.mxu0
    %v1035 = vadd.f32 0.0, %v1034
    %v1036 = vpop.f32.mrf.mxu0
    %v1037 = vadd.f32 0.0, %v1036
    %1038 = vdwg.mxu0
    %v1039 = vmax.f32 %v891, %v905
    %1040 = vmax.xlane.f32.xlu0 %v1039
    %v1041 = vpop.xlane.xlu0 %1040
    %v1042 = vmax.f32 %v893, %v907
    %1043 = vmax.xlane.f32.xlu0 %v1042
    %v1044 = vpop.xlane.xlu0 %1043
    %v1045 = vmax.f32 %v1021, %v1035
    %1046 = vmax.xlane.f32.xlu0 %v1045
    %v1047 = vpop.xlane.xlu0 %1046
    %v1048 = vmax.f32 %v1023, %v1037
    %1049 = vmax.xlane.f32.xlu0 %v1048
    %v1050 = vpop.xlane.xlu0 %1049
    %v1051 = vsub.f32 %v891, %v1041
    %v1052 = vsub.f32 %v905, %v1041
    %v1053 = vsub.f32 %v893, %v1044
    %v1054 = vsub.f32 %v907, %v1044
    %v1055 = vsub.f32 %v1021, %v1047
    %v1056 = vsub.f32 %v1035, %v1047
    %v1057 = vsub.f32 %v1023, %v1050
    %v1058 = vsub.f32 %v1037, %v1050
    %v1059 = vmul.f32 %v1051, 1.442695
    %v1060 = vpow.pop %v1059
    %v1061 = vmul.f32 %v1052, 1.442695
    %v1062 = vpow.pop %v1061
    %v1063 = vmul.f32 %v1053, 1.442695
    %v1064 = vpow.pop %v1063
    %v1065 = vmul.f32 %v1054, 1.442695
    %v1066 = vpow.pop %v1065
    %v1067 = vmul.f32 %v1055, 1.442695
    %v1068 = vpow.pop %v1067
    %v1069 = vmul.f32 %v1056, 1.442695
    %v1070 = vpow.pop %v1069
    %v1071 = vmul.f32 %v1057, 1.442695
    %v1072 = vpow.pop %v1071
    %v1073 = vmul.f32 %v1058, 1.442695
    %v1074 = vpow.pop %v1073
    %v1075 = vpack.c.bf16 %v1062, %v1060
    %v1076 = vpack.c.bf16 %v1066, %v1064
    %v1077 = vpack.c.bf16 %v1070, %v1068
    %v1078 = vpack.c.bf16 %v1074, %v1072
    %v1081 = vunpack.c.l.b16 %v1075
    %v1082 = vunpack.c.h.b16 %v1075
    %v1083 = vunpack.c.l.b16 %v1076
    %v1084 = vunpack.c.h.b16 %v1076
    %v1085 = vpack.c.b16 %v1083, %v1081
    %v1086 = vpack.c.b16 %v1084, %v1082
    %v1121 = vunpack.c.l.b16 %v715
    %v1122 = vunpack.c.l.b16 %v716
    %v1123 = vunpack.c.l.b16 %v717
    %v1124 = vunpack.c.l.b16 %v718
    %v1125 = vunpack.c.l.b16 %v719
    %v1126 = vunpack.c.l.b16 %v720
    %v1127 = vunpack.c.l.b16 %v721
    %v1128 = vunpack.c.l.b16 %v722
    %v1129 = vunpack.c.l.b16 %v723
    %v1130 = vunpack.c.l.b16 %v724
    %v1131 = vunpack.c.l.b16 %v725
    %v1132 = vunpack.c.l.b16 %v726
    %v1133 = vunpack.c.l.b16 %v727
    %v1134 = vunpack.c.l.b16 %v728
    %v1135 = vunpack.c.l.b16 %v729
    %v1136 = vunpack.c.l.b16 %v730
    %v1137 = vunpack.c.l.b16 %v731
    %v1138 = vunpack.c.l.b16 %v732
    %v1139 = vunpack.c.l.b16 %v733
    %v1140 = vunpack.c.l.b16 %v734
    %v1141 = vunpack.c.l.b16 %v735
    %v1142 = vunpack.c.l.b16 %v736
    %v1143 = vunpack.c.l.b16 %v737
    %v1144 = vunpack.c.l.b16 %v738
    %v1145 = vunpack.c.l.b16 %v739
    %v1146 = vunpack.c.l.b16 %v740
    %v1147 = vunpack.c.l.b16 %v741
    %v1148 = vunpack.c.l.b16 %v742
    %v1149 = vunpack.c.l.b16 %v743
    %v1150 = vunpack.c.l.b16 %v744
    %v1151 = vunpack.c.l.b16 %v745
    %v1152 = vunpack.c.l.b16 %v746
    %v1153 = vpack.c.b16 %v1122, %v1121
    %v1154 = vpack.c.b16 %v1124, %v1123
    %v1155 = vpack.c.b16 %v1126, %v1125
    %v1156 = vpack.c.b16 %v1128, %v1127
    %v1157 = vpack.c.b16 %v1130, %v1129
    %v1158 = vpack.c.b16 %v1132, %v1131
    %v1159 = vpack.c.b16 %v1134, %v1133
    %v1160 = vpack.c.b16 %v1136, %v1135
    %v1161 = vpack.c.b16 %v1138, %v1137
    %v1162 = vpack.c.b16 %v1140, %v1139
    %v1163 = vpack.c.b16 %v1142, %v1141
    %v1164 = vpack.c.b16 %v1144, %v1143
    %v1165 = vpack.c.b16 %v1146, %v1145
    %v1166 = vpack.c.b16 %v1148, %v1147
    %v1167 = vpack.c.b16 %v1150, %v1149
    %v1168 = vpack.c.b16 %v1152, %v1151
    %1185 = vmatpush.bf16.msra.mxu0 %v1160
    %1186 = vmatpush.bf16.msra.mxu0 %v1159
    %1187 = vmatpush.bf16.msra.mxu0 %v1158
    %1188 = vmatpush.bf16.msra.mxu0 %v1157
    %1189 = vmatpush.bf16.msra.mxu0 %v1156
    %1190 = vmatpush.bf16.msra.mxu0 %v1155
    %1191 = vmatpush.bf16.msra.mxu0 %v1154
    %1192 = vmatpush.bf16.msra.mxu0 %v1153
    %1193 = vmatmul.bf16.gmra.mxu0 %v1085
    %v1194 = vpop.f32.mrf.mxu0
    %v1195 = vadd.f32 0.0, %v1194
    %v1196 = vpop.f32.mrf.mxu0
    %v1197 = vadd.f32 0.0, %v1196
    %1198 = vdwg.mxu0
    %1199 = vmatpush.bf16.msra.mxu0 %v1168
    %1200 = vmatpush.bf16.msra.mxu0 %v1167
    %1201 = vmatpush.bf16.msra.mxu0 %v1166
    %1202 = vmatpush.bf16.msra.mxu0 %v1165
    %1203 = vmatpush.bf16.msra.mxu0 %v1164
    %1204 = vmatpush.bf16.msra.mxu0 %v1163
    %1205 = vmatpush.bf16.msra.mxu0 %v1162
    %1206 = vmatpush.bf16.msra.mxu0 %v1161
    %1207 = vmatmul.bf16.gmra.mxu0 %v1086
    %v1208 = vpop.f32.mrf.mxu0
    %v1209 = vadd.f32 %v1195, %v1208
    %v1210 = vpop.f32.mrf.mxu0
    %v1211 = vadd.f32 %v1197, %v1210
    %1212 = vdwg.mxu0
    %v1215 = vunpack.c.l.b16 %v1077
    %v1216 = vunpack.c.h.b16 %v1077
    %v1217 = vunpack.c.l.b16 %v1078
    %v1218 = vunpack.c.h.b16 %v1078
    %v1219 = vpack.c.b16 %v1217, %v1215
    %v1220 = vpack.c.b16 %v1218, %v1216
    %v1255 = vunpack.c.l.b16 %v747
    %v1256 = vunpack.c.l.b16 %v748
    %v1257 = vunpack.c.l.b16 %v749
    %v1258 = vunpack.c.l.b16 %v750
    %v1259 = vunpack.c.l.b16 %v751
    %v1260 = vunpack.c.l.b16 %v752
    %v1261 = vunpack.c.l.b16 %v753
    %v1262 = vunpack.c.l.b16 %v754
    %v1263 = vunpack.c.l.b16 %v755
    %v1264 = vunpack.c.l.b16 %v756
    %v1265 = vunpack.c.l.b16 %v757
    %v1266 = vunpack.c.l.b16 %v758
    %v1267 = vunpack.c.l.b16 %v759
    %v1268 = vunpack.c.l.b16 %v760
    %v1269 = vunpack.c.l.b16 %v761
    %v1270 = vunpack.c.l.b16 %v762
    %v1271 = vunpack.c.l.b16 %v763
    %v1272 = vunpack.c.l.b16 %v764
    %v1273 = vunpack.c.l.b16 %v765
    %v1274 = vunpack.c.l.b16 %v766
    %v1275 = vunpack.c.l.b16 %v767
    %v1276 = vunpack.c.l.b16 %v768
    %v1277 = vunpack.c.l.b16 %v769
    %v1278 = vunpack.c.l.b16 %v770
    %v1279 = vunpack.c.l.b16 %v771
    %v1280 = vunpack.c.l.b16 %v772
    %v1281 = vunpack.c.l.b16 %v773
    %v1282 = vunpack.c.l.b16 %v774
    %v1283 = vunpack.c.l.b16 %v775
    %v1284 = vunpack.c.l.b16 %v776
    %v1285 = vunpack.c.l.b16 %v777
    %v1286 = vunpack.c.l.b16 %v778
    %v1287 = vpack.c.b16 %v1256, %v1255
    %v1288 = vpack.c.b16 %v1258, %v1257
    %v1289 = vpack.c.b16 %v1260, %v1259
    %v1290 = vpack.c.b16 %v1262, %v1261
    %v1291 = vpack.c.b16 %v1264, %v1263
    %v1292 = vpack.c.b16 %v1266, %v1265
    %v1293 = vpack.c.b16 %v1268, %v1267
    %v1294 = vpack.c.b16 %v1270, %v1269
    %v1295 = vpack.c.b16 %v1272, %v1271
    %v1296 = vpack.c.b16 %v1274, %v1273
    %v1297 = vpack.c.b16 %v1276, %v1275
    %v1298 = vpack.c.b16 %v1278, %v1277
    %v1299 = vpack.c.b16 %v1280, %v1279
    %v1300 = vpack.c.b16 %v1282, %v1281
    %v1301 = vpack.c.b16 %v1284, %v1283
    %v1302 = vpack.c.b16 %v1286, %v1285
    %1319 = vmatpush.bf16.msra.mxu0 %v1294
    %1320 = vmatpush.bf16.msra.mxu0 %v1293
    %1321 = vmatpush.bf16.msra.mxu0 %v1292
    %1322 = vmatpush.bf16.msra.mxu0 %v1291
    %1323 = vmatpush.bf16.msra.mxu0 %v1290
    %1324 = vmatpush.bf16.msra.mxu0 %v1289
    %1325 = vmatpush.bf16.msra.mxu0 %v1288
    %1326 = vmatpush.bf16.msra.mxu0 %v1287
    %1327 = vmatmul.bf16.gmra.mxu0 %v1219
    %v1328 = vpop.f32.mrf.mxu0
    %v1329 = vadd.f32 0.0, %v1328
    %v1330 = vpop.f32.mrf.mxu0
    %v1331 = vadd.f32 0.0, %v1330
    %1332 = vdwg.mxu0
    %1333 = vmatpush.bf16.msra.mxu0 %v1302
    %1334 = vmatpush.bf16.msra.mxu0 %v1301
    %1335 = vmatpush.bf16.msra.mxu0 %v1300
    %1336 = vmatpush.bf16.msra.mxu0 %v1299
    %1337 = vmatpush.bf16.msra.mxu0 %v1298
    %1338 = vmatpush.bf16.msra.mxu0 %v1297
    %1339 = vmatpush.bf16.msra.mxu0 %v1296
    %1340 = vmatpush.bf16.msra.mxu0 %v1295
    %1341 = vmatmul.bf16.gmra.mxu0 %v1220
    %v1342 = vpop.f32.mrf.mxu0
    %v1343 = vadd.f32 %v1329, %v1342
    %v1344 = vpop.f32.mrf.mxu0
    %v1345 = vadd.f32 %v1331, %v1344
    %1346 = vdwg.mxu0
    %1347 = vmatpush.msra.mxu0 %v502
    %1348 = vmatpush.msra.mxu0 %v501
    %1349 = vmatpush.msra.mxu0 %v500
    %1350 = vmatpush.msra.mxu0 %v499
    %1351 = vmatpush.msra.mxu0 %v498
    %1352 = vmatpush.msra.mxu0 %v497
    %1353 = vmatpush.msra.mxu0 %v496
    %1354 = vmatpush.msra.mxu0 %v495
    %1355 = vmatpush.msra.mxu0 %v494
    %1356 = vmatpush.msra.mxu0 %v493
    %1357 = vmatpush.msra.mxu0 %v492
    %1358 = vmatpush.msra.mxu0 %v491
    %1359 = vmatpush.msra.mxu0 %v490
    %1360 = vmatpush.msra.mxu0 %v489
    %1361 = vmatpush.msra.mxu0 %v488
    %1362 = vmatpush.msra.mxu0 %v487
    %1363 = vmatmul.f32.gmra.mxu0 %v1060
    %v1364 = vpop.f32.mrf.mxu0
    %v1365 = vadd.f32 0.0, %v1364
    %1366 = vmatmul.f32.gmra.mxu0 %v1064
    %v1367 = vpop.f32.mrf.mxu0
    %v1368 = vadd.f32 0.0, %v1367
    %1369 = vmatmul.f32.gmra.mxu0 %v1068
    %v1370 = vpop.f32.mrf.mxu0
    %v1371 = vadd.f32 0.0, %v1370
    %1372 = vmatmul.f32.gmra.mxu0 %v1072
    %v1373 = vpop.f32.mrf.mxu0
    %v1374 = vadd.f32 0.0, %v1373
    %1375 = vdwg.mxu0
    %1376 = vmatpush.msra.mxu0 %v518
    %1377 = vmatpush.msra.mxu0 %v517
    %1378 = vmatpush.msra.mxu0 %v516
    %1379 = vmatpush.msra.mxu0 %v515
    %1380 = vmatpush.msra.mxu0 %v514
    %1381 = vmatpush.msra.mxu0 %v513
    %1382 = vmatpush.msra.mxu0 %v512
    %1383 = vmatpush.msra.mxu0 %v511
    %1384 = vmatpush.msra.mxu0 %v510
    %1385 = vmatpush.msra.mxu0 %v509
    %1386 = vmatpush.msra.mxu0 %v508
    %1387 = vmatpush.msra.mxu0 %v507
    %1388 = vmatpush.msra.mxu0 %v506
    %1389 = vmatpush.msra.mxu0 %v505
    %1390 = vmatpush.msra.mxu0 %v504
    %1391 = vmatpush.msra.mxu0 %v503
    %1392 = vmatmul.f32.gmra.mxu0 %v1062
    %v1393 = vpop.f32.mrf.mxu0
    %v1394 = vadd.f32 %v1365, %v1393
    %1395 = vmatmul.f32.gmra.mxu0 %v1066
    %v1396 = vpop.f32.mrf.mxu0
    %v1397 = vadd.f32 %v1368, %v1396
    %1398 = vmatmul.f32.gmra.mxu0 %v1070
    %v1399 = vpop.f32.mrf.mxu0
    %v1400 = vadd.f32 %v1371, %v1399
    %1401 = vmatmul.f32.gmra.mxu0 %v1074
    %v1402 = vpop.f32.mrf.mxu0
    %v1403 = vadd.f32 %v1374, %v1402
    %1404 = vdwg.mxu0
    %v1405 = vrcp.pop %v1394
    %v1406 = vrcp.pop %v1397
    %v1407 = vrcp.pop %v1400
    %v1408 = vrcp.pop %v1403
    %v1409 = vmul.f32 %v1209, %v1405
    %v1410 = vmul.f32 %v1211, %v1406
    %v1411 = vmul.f32 %v1343, %v1407
    %v1412 = vmul.f32 %v1345, %v1408
    %v1413 = vpack.c.bf16 %v1410, %v1409
    %v1414 = vpack.c.bf16 %v1412, %v1411
    %v1415 = vld [vmem:[#allocation10] sm:$0xf]
    %v1416 = vld [vmem:[#allocation10 + $0x4] sm:$0xf]
    %v1417 = vld [vmem:[#allocation10 + $0x8] sm:$0xf]
    %v1418 = vld [vmem:[#allocation10 + $0xc] sm:$0xf]
    %v1419 = vld [vmem:[#allocation10 + $0x10] sm:$0xf]
    %v1420 = vld [vmem:[#allocation10 + $0x14] sm:$0xf]
    %v1421 = vld [vmem:[#allocation10 + $0x18] sm:$0xf]
    %v1422 = vld [vmem:[#allocation10 + $0x1c] sm:$0xf]
    %v1423 = vld [vmem:[#allocation10 + $0x20] sm:$0xf]
    %v1424 = vld [vmem:[#allocation10 + $0x24] sm:$0xf]
    %v1425 = vld [vmem:[#allocation10 + $0x28] sm:$0xf]
    %v1426 = vld [vmem:[#allocation10 + $0x2c] sm:$0xf]
    %v1427 = vld [vmem:[#allocation10 + $0x30] sm:$0xf]
    %v1428 = vld [vmem:[#allocation10 + $0x34] sm:$0xf]
    %v1429 = vld [vmem:[#allocation10 + $0x38] sm:$0xf]
    %v1430 = vld [vmem:[#allocation10 + $0x3c] sm:$0xf]
    %v1431 = vld [vmem:[%s6] sm:$0x1]
    %v1433 = vperm.slane %v1431, 0
    %v1451 = vunpack.c.l.b16 %v1415
    %v1452 = vunpack.c.l.b16 %v1416
    %v1453 = vunpack.c.l.b16 %v1417
    %v1454 = vunpack.c.l.b16 %v1418
    %v1455 = vunpack.c.l.b16 %v1419
    %v1456 = vunpack.c.l.b16 %v1420
    %v1457 = vunpack.c.l.b16 %v1421
    %v1458 = vunpack.c.l.b16 %v1422
    %v1459 = vunpack.c.l.b16 %v1423
    %v1460 = vunpack.c.l.b16 %v1424
    %v1461 = vunpack.c.l.b16 %v1425
    %v1462 = vunpack.c.l.b16 %v1426
    %v1463 = vunpack.c.l.b16 %v1427
    %v1464 = vunpack.c.l.b16 %v1428
    %v1465 = vunpack.c.l.b16 %v1429
    %v1466 = vunpack.c.l.b16 %v1430
    %v1467 = vpack.c.b16 %v1452, %v1451
    %v1468 = vpack.c.b16 %v1454, %v1453
    %v1469 = vpack.c.b16 %v1456, %v1455
    %v1470 = vpack.c.b16 %v1458, %v1457
    %v1471 = vpack.c.b16 %v1460, %v1459
    %v1472 = vpack.c.b16 %v1462, %v1461
    %v1473 = vpack.c.b16 %v1464, %v1463
    %v1474 = vpack.c.b16 %v1466, %v1465
    %1483 = vmatpush.bf16.msra.mxu0 %v1474
    %1484 = vmatpush.bf16.msra.mxu0 %v1473
    %1485 = vmatpush.bf16.msra.mxu0 %v1472
    %1486 = vmatpush.bf16.msra.mxu0 %v1471
    %1487 = vmatpush.bf16.msra.mxu0 %v1470
    %1488 = vmatpush.bf16.msra.mxu0 %v1469
    %1489 = vmatpush.bf16.msra.mxu0 %v1468
    %1490 = vmatpush.bf16.msra.mxu0 %v1467
    %1491 = vmatmul.bf16.gmra.mxu0 %v1413
    %v1492 = vpop.f32.mrf.mxu0
    %v1493 = vadd.f32 %v1433, %v1492
    %v1494 = vpop.f32.mrf.mxu0
    %v1495 = vadd.f32 %v1433, %v1494
    %1496 = vmatmul.bf16.gmra.mxu0 %v1414
    %v1497 = vpop.f32.mrf.mxu0
    %v1498 = vadd.f32 %v1433, %v1497
    %v1499 = vpop.f32.mrf.mxu0
    %v1500 = vadd.f32 %v1433, %v1499
    %1501 = vdwg.mxu0
    %v1502 = vadd.f32 %v1493, %v264
    %v1503 = vadd.f32 %v1495, %v265
    %v1504 = vadd.f32 %v1498, %v266
    %v1505 = vadd.f32 %v1500, %v267
    %1506 = vst [vmem:[#allocation13] sm:$0xff] %v1502
    %1507 = vst [vmem:[#allocation13 + $0x8] sm:$0xff] %v1503
    %1508 = vst [vmem:[#allocation13 + $0x10] sm:$0xff] %v1504
    %1509 = vst [vmem:[#allocation13 + $0x18] sm:$0xff] %v1505
    // Predicated region
    $region58: #{tpu_custom_call.1} parent=1 // pred_check
      _
    $region59: #{tpu_custom_call.1} parent=1 // pred_check_branch
      %1511 = sbr.rel (0) target = $region61
    $region60: #{tpu_custom_call.1} parent=1 // pred_region
      %1513 = vsyncadd [#allocation4], 0
      %s1514 = sshll.u32 [#allocation13], 4
      %s1515 = int_to_ptr.vmem [resolvable:$true] %s1514
      %s1516 = sshll.u32 %s8, 4
      %s1517 = int_to_ptr.hbm [resolvable:$true] %s1516
      %1522 = dma.vmem_to_hbm [thread:$0]  %s1515, 512, %s1517, [#allocation4], 128, 128, 8
    $region61: #{tpu_custom_call.1} parent=1 // pred_fallthru
      _
    // Predicated region
    $region62: #{tpu_custom_call.1} parent=1 // pred_check
      _
    $region63: #{tpu_custom_call.1} parent=1 // pred_check_branch
      %1524 = sbr.rel (0) target = $region65
    $region64: #{tpu_custom_call.1} parent=1 // pred_region
      %1526 = dma.done [#allocation4], 512
    $region65: #{tpu_custom_call.1} parent=1 // pred_fallthru
      _
    %1527 = vsyncpa [#allocation3], 1
    %1528 = vsyncpa [#allocation6], 1
    %1529 = vsyncpa [#allocation9], 1
    %1530 = vsyncpa [#allocation12], 1
    %1531 = vsyncpa [#allocation4], 1

</llo_original>
